<compile_context>
chip_gen: v7x
topology: tpu7x:2x2x1
jax: 0.10.0
libtpu: 0.0.40
codegen_flags: <defaults>
</compile_context>

<pallas_src>
import numpy as np
import jax
import jax.numpy as jnp
from jax import lax
from jax.experimental import pallas as pl
from jax.experimental.pallas import tpu as pltpu

GAMMA = 10.0
MARGIN = 0.1

# geomloss epsilon-scaling schedule: p=2, diameter=3, blur=0.05, scaling=0.5 (8 steps)
_P, _BLUR, _SCALING, _DIAMETER = 2, 0.05, 0.5, 3.0
_EPS_LIST = tuple(
    [_DIAMETER ** _P]
    + [float(np.exp(e)) for e in np.arange(_P * np.log(_DIAMETER),
                                           _P * np.log(_BLUR),
                                           _P * np.log(_SCALING))]
    + [_BLUR ** _P]
)


def _make_kernel(N, N1, M1, eps_list):
    Nx = N + N1      # rows of cost matrix (x-side: pos + neg)
    Ny = N + M1      # cols of cost matrix (y-side: pos + neg)

    def softmin_cols(eps, Ceps, h):
        # -eps * logsumexp_j (h[..., j] - C[..., i, j]/eps) -> (BB, Nx, 1)
        s = h - Ceps
        m = jnp.max(s, axis=2, keepdims=True)
        return -eps * (jnp.log(jnp.sum(jnp.exp(s - m), axis=2, keepdims=True)) + m)

    def softmin_rows(eps, Ceps, h):
        # C_yx == C_xy^T, so reduce over rows -> (BB, 1, Ny)
        s = h - Ceps
        m = jnp.max(s, axis=1, keepdims=True)
        return -eps * (jnp.log(jnp.sum(jnp.exp(s - m), axis=1, keepdims=True)) + m)

    def kernel(x1_ref, x2_ref, x3_ref, x4_ref, ot_ref, hinge_ref):
        x1 = x1_ref[...].astype(jnp.float32)          # (BB, N,  D)
        x2 = x2_ref[...].astype(jnp.float32)          # (BB, N,  D)
        x3 = x3_ref[...].astype(jnp.float32)          # (BB, N1, D)
        x4 = x4_ref[...].astype(jnp.float32)          # (BB, M1, D)

        f1 = jnp.concatenate([x1, x3], axis=1)        # (BB, Nx, D)
        f2 = jnp.concatenate([x2, x4], axis=1)        # (BB, Ny, D)

        # ---- similarity_cost(f1, f2) -> C  (C_yx == C^T) ---------------------
        inv1 = lax.rsqrt(jnp.maximum(jnp.sum(f1 * f1, axis=-1, keepdims=True), 1e-24))
        inv2 = lax.rsqrt(jnp.maximum(jnp.sum(f2 * f2, axis=-1, keepdims=True), 1e-24))
        dots = jnp.einsum('bnd,bmd->bnm', f1 * inv1, f2 * inv2,
                          preferred_element_type=jnp.float32)      # (BB, Nx, Ny)
        sim = jnp.exp(GAMMA * dots)
        sim_c = jnp.sum(sim, axis=1, keepdims=True)                 # (BB, 1, Ny)
        sim_r = jnp.sum(sim, axis=2, keepdims=True)                 # (BB, Nx, 1)
        C = 1.0 - sim / (sim_c + sim_r - sim)                       # exact divide

        # ---- marginals / log-weights (ones on positives, zeros on negatives) -
        rid = lax.broadcasted_iota(jnp.int32, (1, Nx, 1), 1)
        cid = lax.broadcasted_iota(jnp.int32, (1, 1, Ny), 2)
        alpha = jnp.where(rid < N, 1.0, 0.0)                        # (1, Nx, 1)
        beta = jnp.where(cid < N, 1.0, 0.0)                         # (1, 1, Ny)
        a_log = jnp.where(rid < N, 0.0, -100000.0)                  # geomloss log-weights
        b_log = jnp.where(cid < N, 0.0, -100000.0)

        # ---- symmetric Sinkhorn loop (debias=False, rho=None, damping=1) -----
        eps0 = eps_list[0]
        inv_e = 1.0 / eps0
        Ceps = C * inv_e
        g_ab = softmin_rows(eps0, Ceps, a_log)                      # (BB, 1, Ny)
        f_ba = softmin_cols(eps0, Ceps, b_log)                      # (BB, Nx, 1)

        for eps in eps_list:                                        # 8 steps, unrolled
            inv_e = 1.0 / eps
            Ceps = C * inv_e                                        # shared by both softmins
            ft = softmin_cols(eps, Ceps, b_log + g_ab * inv_e)
            gt = softmin_rows(eps, Ceps, a_log + f_ba * inv_e)
            f_ba = 0.5 * (f_ba + ft)
            g_ab = 0.5 * (g_ab + gt)

        eps = eps_list[-1]                                          # final extrapolation
        inv_e = 1.0 / eps
        # Ceps from the last loop iteration already equals C * (1/eps_list[-1]); reuse it.
        f_new = softmin_cols(eps, Ceps, b_log + g_ab * inv_e)
        g_new = softmin_rows(eps, Ceps, a_log + f_ba * inv_e)
        f_ba, g_ab = f_new, g_new

        ot_ref[...] = (jnp.sum(alpha * f_ba, axis=1, keepdims=True)
                       + jnp.sum(beta * g_ab, axis=2, keepdims=True))  # (BB, 1, 1)

        # ---- hinge term on the raw (un-normalized) negative features ---------
        neg = jnp.einsum('bnd,bmd->bnm', x3, x4,
                         preferred_element_type=jnp.float32)           # (BB, N1, M1)
        relu = jnp.maximum(MARGIN - neg, 0.0)
        hinge_ref[...] = jnp.sum(jnp.sum(relu, axis=2, keepdims=True),
                                 axis=1, keepdims=True)                # (BB, 1, 1)

    return kernel


def gml_forward(x1, x2, x3, x4, dist):
    """x1,x2: [B,N,D] positives; x3,x4: [B,N1,D]/[B,M1,D] negatives; dist: unused."""
    del dist  # stored by the PyTorch module but never used for the returned values
    B, N, D = x1.shape
    N1, M1 = x3.shape[1], x4.shape[1]
    assert x2.shape[1] == N

    # ---- batch blocking: amortize per-grid-step overhead with minimal padding ----
    max_bb = 64
    num_blocks = -(-B // max_bb)          # ceil(B / 64)
    BB = -(-B // num_blocks)              # ceil(B / num_blocks)  (<= 64)
    B_pad = BB * num_blocks

    def _pad(x):
        if B_pad == B:
            return x
        return jnp.pad(x, ((0, B_pad - B), (0, 0), (0, 0)))

    x1p, x2p, x3p, x4p = (_pad(x1), _pad(x2), _pad(x3), _pad(x4))

    kernel = _make_kernel(N, N1, M1, _EPS_LIST)

    ot, hinge = pl.pallas_call(
        kernel,
        out_shape=(jax.ShapeDtypeStruct((B_pad, 1, 1), jnp.float32),
                   jax.ShapeDtypeStruct((B_pad, 1, 1), jnp.float32)),
        grid_spec=pltpu.PrefetchScalarGridSpec(
            num_scalar_prefetch=0,
            grid=(num_blocks,),
            in_specs=[pl.BlockSpec((BB, N, D), lambda i: (i, 0, 0)),
                      pl.BlockSpec((BB, N, D), lambda i: (i, 0, 0)),
                      pl.BlockSpec((BB, N1, D), lambda i: (i, 0, 0)),
                      pl.BlockSpec((BB, M1, D), lambda i: (i, 0, 0))],
            out_specs=(pl.BlockSpec((BB, 1, 1), lambda i: (i, 0, 0)),
                       pl.BlockSpec((BB, 1, 1), lambda i: (i, 0, 0))),
        ),
        compiler_params=pltpu.CompilerParams(dimension_semantics=("parallel",)),
    )(x1p, x2p, x3p, x4p)

    ot_b = ot.reshape(B_pad)[:B]           # drop zero-padded batches
    hinge_b = hinge.reshape(B_pad)[:B]
    hinge_cost = jnp.sum(hinge_b).reshape(1)        # loss.unsqueeze(0)
    scon_cost = (jnp.sum(ot_b) / B).reshape(1)      # sum(ot_loss) / len(ot_loss)
    return {"hinge_cost": hinge_cost, "scon_cost": scon_cost}


# ---------------- pure-JAX reference (mirrors the PyTorch/geomloss math) -------------
def _ref_forward(x1, x2, x3, x4):
    B, N, D = x1.shape

    def cost(a, c):
        an = a / jnp.maximum(jnp.linalg.norm(a, axis=-1, keepdims=True), 1e-12)
        cn = c / jnp.maximum(jnp.linalg.norm(c, axis=-1, keepdims=True), 1e-12)
        sim = jnp.exp(GAMMA * an @ cn.T)
        sim_c = sim.sum(0, keepdims=True)
        sim_r = sim.sum(1, keepdims=True)
        return 1.0 - sim / (sim_c + sim_r - sim)

    def softmin(eps, C, h):
        return -eps * jax.scipy.special.logsumexp(h[None, :] - C / eps, axis=1)

    ot_losses, hinge = [], 0.0
    for b in range(B):
        f1 = jnp.concatenate([x1[b], x3[b]], 0)
        f2 = jnp.concatenate([x2[b], x4[b]], 0)
        C_xy, C_yx = cost(f1, f2), cost(f2, f1)
        a_log = jnp.concatenate([jnp.zeros(N), jnp.full((x3.shape[1],), -100000.0)])
        b_log = jnp.concatenate([jnp.zeros(N), jnp.full((x4.shape[1],), -100000.0)])
        alpha = jnp.concatenate([jnp.ones(N), jnp.zeros(x3.shape[1])])
        beta = jnp.concatenate([jnp.ones(N), jnp.zeros(x4.shape[1])])
        eps0 = _EPS_LIST[0]
        g_ab = softmin(eps0, C_yx, a_log)
        f_ba = softmin(eps0, C_xy, b_log)
        for eps in _EPS_LIST:
            ft = softmin(eps, C_xy, b_log + g_ab / eps)
            gt = softmin(eps, C_yx, a_log + f_ba / eps)
            f_ba, g_ab = 0.5 * (f_ba + ft), 0.5 * (g_ab + gt)
        eps = _EPS_LIST[-1]
        f_ba, g_ab = (softmin(eps, C_xy, b_log + g_ab / eps),
                      softmin(eps, C_yx, a_log + f_ba / eps))
        ot_losses.append(jnp.sum(alpha * f_ba) + jnp.sum(beta * g_ab))
        hinge = hinge + jnp.sum(jnp.maximum(MARGIN - x3[b] @ x4[b].T, 0.0))
    return {"hinge_cost": jnp.reshape(hinge, (1,)),
            "scon_cost": jnp.reshape(sum(ot_losses) / B, (1,))}


if __name__ == "__main__":
    B, N, N1, M1, D = 2, 8, 8, 8, 32
    key = jax.random.PRNGKey(0)
    k1, k2, k3, k4, k5 = jax.random.split(key, 5)
    x1 = jax.random.normal(k1, (B, N, D), jnp.float32)
    x2 = jax.random.normal(k2, (B, N, D), jnp.float32)
    x3 = jax.random.normal(k3, (B, N1, D), jnp.float32)
    x4 = jax.random.normal(k4, (B, M1, D), jnp.float32)
    dist = jax.random.uniform(k5, (B, N, N), jnp.float32)

    out = jax.jit(gml_forward)(x1, x2, x3, x4, dist)
    out = jax.block_until_ready(out)

    ref = _ref_forward(x1, x2, x3, x4)
    np.testing.assert_allclose(np.asarray(out["hinge_cost"]),
                               np.asarray(ref["hinge_cost"]), rtol=1e-3, atol=1e-3)
    np.testing.assert_allclose(np.asarray(out["scon_cost"]),
                               np.asarray(ref["scon_cost"]), rtol=1e-3, atol=1e-3)
    assert np.all(np.isfinite(np.asarray(out["hinge_cost"])))
    assert np.all(np.isfinite(np.asarray(out["scon_cost"])))
    print("KERNEL_OK")
</pallas_src>

<mosaic_0001>
module attributes {stable_mosaic.version = 11 : i64} {
  func.func @kernel(%arg0: i32, %arg1: memref<2x8x32xf32, #tpu.memory_space<vmem>>, %arg2: memref<2x8x32xf32, #tpu.memory_space<vmem>>, %arg3: memref<2x8x32xf32, #tpu.memory_space<vmem>>, %arg4: memref<2x8x32xf32, #tpu.memory_space<vmem>>, %arg5: memref<2x1x1xf32, #tpu.memory_space<vmem>>, %arg6: memref<2x1x1xf32, #tpu.memory_space<vmem>>) attributes {dimension_semantics = [#tpu.dimension_semantics<parallel>], iteration_bounds = array<i64: 1>, scalar_prefetch = 0 : i64, scratch_operands = 0 : i64, tpu.core_type = #tpu.core_type<tc>, window_params = [{transform_indices = @transform_0, window_bounds = array<i64: 2, 8, 32>}, {transform_indices = @transform_1, window_bounds = array<i64: 2, 8, 32>}, {transform_indices = @transform_2, window_bounds = array<i64: 2, 8, 32>}, {transform_indices = @transform_3, window_bounds = array<i64: 2, 8, 32>}, {transform_indices = @transform_4, window_bounds = array<i64: 2, 1, 1>}, {transform_indices = @transform_5, window_bounds = array<i64: 2, 1, 1>}]} {
    %c0 = arith.constant 0 : index
    %c0_0 = arith.constant 0 : index
    %c0_1 = arith.constant 0 : index
    %0 = vector.load %arg1[%c0, %c0_0, %c0_1] : memref<2x8x32xf32, #tpu.memory_space<vmem>>, vector<2x8x32xf32>
    %c0_2 = arith.constant 0 : index
    %c0_3 = arith.constant 0 : index
    %c0_4 = arith.constant 0 : index
    %1 = vector.load %arg2[%c0_2, %c0_3, %c0_4] : memref<2x8x32xf32, #tpu.memory_space<vmem>>, vector<2x8x32xf32>
    %c0_5 = arith.constant 0 : index
    %c0_6 = arith.constant 0 : index
    %c0_7 = arith.constant 0 : index
    %2 = vector.load %arg3[%c0_5, %c0_6, %c0_7] : memref<2x8x32xf32, #tpu.memory_space<vmem>>, vector<2x8x32xf32>
    %c0_8 = arith.constant 0 : index
    %c0_9 = arith.constant 0 : index
    %c0_10 = arith.constant 0 : index
    %3 = vector.load %arg4[%c0_8, %c0_9, %c0_10] : memref<2x8x32xf32, #tpu.memory_space<vmem>>, vector<2x8x32xf32>
    %4 = tpu.concatenate %0, %2 in 1 : vector<2x8x32xf32>, vector<2x8x32xf32> -> vector<2x16x32xf32>
    %5 = tpu.concatenate %1, %3 in 1 : vector<2x8x32xf32>, vector<2x8x32xf32> -> vector<2x16x32xf32>
    %6 = arith.mulf %4, %4 : vector<2x16x32xf32>
    %cst = arith.constant dense<0.000000e+00> : vector<2x16xf32>
    %7 = vector.multi_reduction <add>, %6, %cst [2] : vector<2x16x32xf32> to vector<2x16xf32>
    %8 = vector.shape_cast %7 : vector<2x16xf32> to vector<2x16x1xf32>
    %cst_11 = arith.constant 1.000000e-24 : f32
    %9 = vector.broadcast %cst_11 : f32 to vector<2x16x1xf32>
    %10 = arith.maximumf %8, %9 : vector<2x16x1xf32>
    %11 = math.rsqrt %10 : vector<2x16x1xf32>
    %12 = arith.mulf %5, %5 : vector<2x16x32xf32>
    %cst_12 = arith.constant dense<0.000000e+00> : vector<2x16xf32>
    %13 = vector.multi_reduction <add>, %12, %cst_12 [2] : vector<2x16x32xf32> to vector<2x16xf32>
    %14 = vector.shape_cast %13 : vector<2x16xf32> to vector<2x16x1xf32>
    %cst_13 = arith.constant 1.000000e-24 : f32
    %15 = vector.broadcast %cst_13 : f32 to vector<2x16x1xf32>
    %16 = arith.maximumf %14, %15 : vector<2x16x1xf32>
    %17 = math.rsqrt %16 : vector<2x16x1xf32>
    %18 = vector.broadcast %11 : vector<2x16x1xf32> to vector<2x16x32xf32>
    %19 = arith.mulf %4, %18 : vector<2x16x32xf32>
    %20 = vector.broadcast %17 : vector<2x16x1xf32> to vector<2x16x32xf32>
    %21 = arith.mulf %5, %20 : vector<2x16x32xf32>
    "tpu.trace_start"() <{level = 10 : i32, message = "bnd,bmd->bnm"}> : () -> ()
    %cst_14 = arith.constant dense<0.000000e+00> : vector<2x16x16xf32>
    %22 = tpu.matmul %19, %21, %cst_14 {dimension_numbers = #tpu.dot_dimension_numbers<[2], [2], [1], [1], [0, 0, 0, 1, 1, 1], [0], [0]>} : vector<2x16x32xf32>, vector<2x16x32xf32>, vector<2x16x16xf32> -> vector<2x16x16xf32>
    "tpu.trace_stop"() : () -> ()
    %cst_15 = arith.constant 1.000000e+01 : f32
    %23 = vector.broadcast %cst_15 : f32 to vector<2x16x16xf32>
    %24 = arith.mulf %23, %22 : vector<2x16x16xf32>
    %25 = math.exp %24 : vector<2x16x16xf32>
    %cst_16 = arith.constant dense<0.000000e+00> : vector<2x16xf32>
    %26 = vector.multi_reduction <add>, %25, %cst_16 [1] : vector<2x16x16xf32> to vector<2x16xf32>
    %27 = vector.shape_cast %26 : vector<2x16xf32> to vector<2x1x16xf32>
    %cst_17 = arith.constant dense<0.000000e+00> : vector<2x16xf32>
    %28 = vector.multi_reduction <add>, %25, %cst_17 [2] : vector<2x16x16xf32> to vector<2x16xf32>
    %29 = vector.shape_cast %28 : vector<2x16xf32> to vector<2x16x1xf32>
    %30 = vector.broadcast %27 : vector<2x1x16xf32> to vector<2x16x16xf32>
    %31 = vector.broadcast %29 : vector<2x16x1xf32> to vector<2x16x16xf32>
    %32 = arith.addf %30, %31 : vector<2x16x16xf32>
    %33 = arith.subf %32, %25 : vector<2x16x16xf32>
    %34 = arith.divf %25, %33 : vector<2x16x16xf32>
    %cst_18 = arith.constant 1.000000e+00 : f32
    %35 = vector.broadcast %cst_18 : f32 to vector<2x16x16xf32>
    %36 = arith.subf %35, %34 : vector<2x16x16xf32>
    %37 = tpu.iota {dimensions = array<i32: 1>} : vector<1x16x1xi32>
    %38 = tpu.iota {dimensions = array<i32: 2>} : vector<1x1x16xi32>
    %c8_i32 = arith.constant 8 : i32
    %39 = vector.broadcast %c8_i32 : i32 to vector<1x16x1xi32>
    %40 = arith.cmpi slt, %37, %39 : vector<1x16x1xi32>
    %cst_19 = arith.constant 1.000000e+00 : f32
    %cst_20 = arith.constant 0.000000e+00 : f32
    %41 = vector.broadcast %cst_19 : f32 to vector<1x16x1xf32>
    %42 = vector.broadcast %cst_20 : f32 to vector<1x16x1xf32>
    %43 = arith.select %40, %41, %42 : vector<1x16x1xi1>, vector<1x16x1xf32>
    %c8_i32_21 = arith.constant 8 : i32
    %44 = vector.broadcast %c8_i32_21 : i32 to vector<1x1x16xi32>
    %45 = arith.cmpi slt, %38, %44 : vector<1x1x16xi32>
    %cst_22 = arith.constant 1.000000e+00 : f32
    %cst_23 = arith.constant 0.000000e+00 : f32
    %46 = vector.broadcast %cst_22 : f32 to vector<1x1x16xf32>
    %47 = vector.broadcast %cst_23 : f32 to vector<1x1x16xf32>
    %48 = arith.select %45, %46, %47 : vector<1x1x16xi1>, vector<1x1x16xf32>
    %c8_i32_24 = arith.constant 8 : i32
    %49 = vector.broadcast %c8_i32_24 : i32 to vector<1x16x1xi32>
    %50 = arith.cmpi slt, %37, %49 : vector<1x16x1xi32>
    %cst_25 = arith.constant 0.000000e+00 : f32
    %cst_26 = arith.constant -1.000000e+05 : f32
    %51 = vector.broadcast %cst_25 : f32 to vector<1x16x1xf32>
    %52 = vector.broadcast %cst_26 : f32 to vector<1x16x1xf32>
    %53 = arith.select %50, %51, %52 : vector<1x16x1xi1>, vector<1x16x1xf32>
    %c8_i32_27 = arith.constant 8 : i32
    %54 = vector.broadcast %c8_i32_27 : i32 to vector<1x1x16xi32>
    %55 = arith.cmpi slt, %38, %54 : vector<1x1x16xi32>
    %cst_28 = arith.constant 0.000000e+00 : f32
    %cst_29 = arith.constant -1.000000e+05 : f32
    %56 = vector.broadcast %cst_28 : f32 to vector<1x1x16xf32>
    %57 = vector.broadcast %cst_29 : f32 to vector<1x1x16xf32>
    %58 = arith.select %55, %56, %57 : vector<1x1x16xi1>, vector<1x1x16xf32>
    %cst_30 = arith.constant 0.111111112 : f32
    %59 = vector.broadcast %cst_30 : f32 to vector<2x16x16xf32>
    %60 = arith.mulf %36, %59 : vector<2x16x16xf32>
    %61 = vector.broadcast %53 : vector<1x16x1xf32> to vector<2x16x16xf32>
    %62 = arith.subf %61, %60 : vector<2x16x16xf32>
    %cst_31 = arith.constant dense<0xFF800000> : vector<2x16xf32>
    %63 = vector.multi_reduction <maximumf>, %62, %cst_31 [1] : vector<2x16x16xf32> to vector<2x16xf32>
    %64 = vector.shape_cast %63 : vector<2x16xf32> to vector<2x1x16xf32>
    %65 = vector.broadcast %64 : vector<2x1x16xf32> to vector<2x16x16xf32>
    %66 = arith.subf %62, %65 : vector<2x16x16xf32>
    %67 = math.exp %66 : vector<2x16x16xf32>
    %cst_32 = arith.constant dense<0.000000e+00> : vector<2x16xf32>
    %68 = vector.multi_reduction <add>, %67, %cst_32 [1] : vector<2x16x16xf32> to vector<2x16xf32>
    %69 = vector.shape_cast %68 : vector<2x16xf32> to vector<2x1x16xf32>
    %70 = math.log %69 : vector<2x1x16xf32>
    %71 = arith.addf %70, %64 : vector<2x1x16xf32>
    %cst_33 = arith.constant -9.000000e+00 : f32
    %72 = vector.broadcast %cst_33 : f32 to vector<2x1x16xf32>
    %73 = arith.mulf %72, %71 : vector<2x1x16xf32>
    %74 = vector.broadcast %58 : vector<1x1x16xf32> to vector<2x16x16xf32>
    %75 = arith.subf %74, %60 : vector<2x16x16xf32>
    %cst_34 = arith.constant dense<0xFF800000> : vector<2x16xf32>
    %76 = vector.multi_reduction <maximumf>, %75, %cst_34 [2] : vector<2x16x16xf32> to vector<2x16xf32>
    %77 = vector.shape_cast %76 : vector<2x16xf32> to vector<2x16x1xf32>
    %78 = vector.broadcast %77 : vector<2x16x1xf32> to vector<2x16x16xf32>
    %79 = arith.subf %75, %78 : vector<2x16x16xf32>
    %80 = math.exp %79 : vector<2x16x16xf32>
    %cst_35 = arith.constant dense<0.000000e+00> : vector<2x16xf32>
    %81 = vector.multi_reduction <add>, %80, %cst_35 [2] : vector<2x16x16xf32> to vector<2x16xf32>
    %82 = vector.shape_cast %81 : vector<2x16xf32> to vector<2x16x1xf32>
    %83 = math.log %82 : vector<2x16x1xf32>
    %84 = arith.addf %83, %77 : vector<2x16x1xf32>
    %cst_36 = arith.constant -9.000000e+00 : f32
    %85 = vector.broadcast %cst_36 : f32 to vector<2x16x1xf32>
    %86 = arith.mulf %85, %84 : vector<2x16x1xf32>
    %cst_37 = arith.constant 0.111111112 : f32
    %87 = vector.broadcast %cst_37 : f32 to vector<2x16x16xf32>
    %88 = arith.mulf %36, %87 : vector<2x16x16xf32>
    %cst_38 = arith.constant 0.111111112 : f32
    %89 = vector.broadcast %cst_38 : f32 to vector<2x1x16xf32>
    %90 = arith.mulf %73, %89 : vector<2x1x16xf32>
    %91 = vector.broadcast %58 : vector<1x1x16xf32> to vector<2x1x16xf32>
    %92 = arith.addf %91, %90 : vector<2x1x16xf32>
    %93 = vector.broadcast %92 : vector<2x1x16xf32> to vector<2x16x16xf32>
    %94 = arith.subf %93, %88 : vector<2x16x16xf32>
    %cst_39 = arith.constant dense<0xFF800000> : vector<2x16xf32>
    %95 = vector.multi_reduction <maximumf>, %94, %cst_39 [2] : vector<2x16x16xf32> to vector<2x16xf32>
    %96 = vector.shape_cast %95 : vector<2x16xf32> to vector<2x16x1xf32>
    %97 = vector.broadcast %96 : vector<2x16x1xf32> to vector<2x16x16xf32>
    %98 = arith.subf %94, %97 : vector<2x16x16xf32>
    %99 = math.exp %98 : vector<2x16x16xf32>
    %cst_40 = arith.constant dense<0.000000e+00> : vector<2x16xf32>
    %100 = vector.multi_reduction <add>, %99, %cst_40 [2] : vector<2x16x16xf32> to vector<2x16xf32>
    %101 = vector.shape_cast %100 : vector<2x16xf32> to vector<2x16x1xf32>
    %102 = math.log %101 : vector<2x16x1xf32>
    %103 = arith.addf %102, %96 : vector<2x16x1xf32>
    %cst_41 = arith.constant -9.000000e+00 : f32
    %104 = vector.broadcast %cst_41 : f32 to vector<2x16x1xf32>
    %105 = arith.mulf %104, %103 : vector<2x16x1xf32>
    %cst_42 = arith.constant 0.111111112 : f32
    %106 = vector.broadcast %cst_42 : f32 to vector<2x16x1xf32>
    %107 = arith.mulf %86, %106 : vector<2x16x1xf32>
    %108 = vector.broadcast %53 : vector<1x16x1xf32> to vector<2x16x1xf32>
    %109 = arith.addf %108, %107 : vector<2x16x1xf32>
    %110 = vector.broadcast %109 : vector<2x16x1xf32> to vector<2x16x16xf32>
    %111 = arith.subf %110, %88 : vector<2x16x16xf32>
    %cst_43 = arith.constant dense<0xFF800000> : vector<2x16xf32>
    %112 = vector.multi_reduction <maximumf>, %111, %cst_43 [1] : vector<2x16x16xf32> to vector<2x16xf32>
    %113 = vector.shape_cast %112 : vector<2x16xf32> to vector<2x1x16xf32>
    %114 = vector.broadcast %113 : vector<2x1x16xf32> to vector<2x16x16xf32>
    %115 = arith.subf %111, %114 : vector<2x16x16xf32>
    %116 = math.exp %115 : vector<2x16x16xf32>
    %cst_44 = arith.constant dense<0.000000e+00> : vector<2x16xf32>
    %117 = vector.multi_reduction <add>, %116, %cst_44 [1] : vector<2x16x16xf32> to vector<2x16xf32>
    %118 = vector.shape_cast %117 : vector<2x16xf32> to vector<2x1x16xf32>
    %119 = math.log %118 : vector<2x1x16xf32>
    %120 = arith.addf %119, %113 : vector<2x1x16xf32>
    %cst_45 = arith.constant -9.000000e+00 : f32
    %121 = vector.broadcast %cst_45 : f32 to vector<2x1x16xf32>
    %122 = arith.mulf %121, %120 : vector<2x1x16xf32>
    %123 = arith.addf %86, %105 : vector<2x16x1xf32>
    %cst_46 = arith.constant 5.000000e-01 : f32
    %124 = vector.broadcast %cst_46 : f32 to vector<2x16x1xf32>
    %125 = arith.mulf %124, %123 : vector<2x16x1xf32>
    %126 = arith.addf %73, %122 : vector<2x1x16xf32>
    %cst_47 = arith.constant 5.000000e-01 : f32
    %127 = vector.broadcast %cst_47 : f32 to vector<2x1x16xf32>
    %128 = arith.mulf %127, %126 : vector<2x1x16xf32>
    %cst_48 = arith.constant 0.111111112 : f32
    %129 = vector.broadcast %cst_48 : f32 to vector<2x16x16xf32>
    %130 = arith.mulf %36, %129 : vector<2x16x16xf32>
    %cst_49 = arith.constant 0.111111112 : f32
    %131 = vector.broadcast %cst_49 : f32 to vector<2x1x16xf32>
    %132 = arith.mulf %128, %131 : vector<2x1x16xf32>
    %133 = vector.broadcast %58 : vector<1x1x16xf32> to vector<2x1x16xf32>
    %134 = arith.addf %133, %132 : vector<2x1x16xf32>
    %135 = vector.broadcast %134 : vector<2x1x16xf32> to vector<2x16x16xf32>
    %136 = arith.subf %135, %130 : vector<2x16x16xf32>
    %cst_50 = arith.constant dense<0xFF800000> : vector<2x16xf32>
    %137 = vector.multi_reduction <maximumf>, %136, %cst_50 [2] : vector<2x16x16xf32> to vector<2x16xf32>
    %138 = vector.shape_cast %137 : vector<2x16xf32> to vector<2x16x1xf32>
    %139 = vector.broadcast %138 : vector<2x16x1xf32> to vector<2x16x16xf32>
    %140 = arith.subf %136, %139 : vector<2x16x16xf32>
    %141 = math.exp %140 : vector<2x16x16xf32>
    %cst_51 = arith.constant dense<0.000000e+00> : vector<2x16xf32>
    %142 = vector.multi_reduction <add>, %141, %cst_51 [2] : vector<2x16x16xf32> to vector<2x16xf32>
    %143 = vector.shape_cast %142 : vector<2x16xf32> to vector<2x16x1xf32>
    %144 = math.log %143 : vector<2x16x1xf32>
    %145 = arith.addf %144, %138 : vector<2x16x1xf32>
    %cst_52 = arith.constant -9.000000e+00 : f32
    %146 = vector.broadcast %cst_52 : f32 to vector<2x16x1xf32>
    %147 = arith.mulf %146, %145 : vector<2x16x1xf32>
    %cst_53 = arith.constant 0.111111112 : f32
    %148 = vector.broadcast %cst_53 : f32 to vector<2x16x1xf32>
    %149 = arith.mulf %125, %148 : vector<2x16x1xf32>
    %150 = vector.broadcast %53 : vector<1x16x1xf32> to vector<2x16x1xf32>
    %151 = arith.addf %150, %149 : vector<2x16x1xf32>
    %152 = vector.broadcast %151 : vector<2x16x1xf32> to vector<2x16x16xf32>
    %153 = arith.subf %152, %130 : vector<2x16x16xf32>
    %cst_54 = arith.constant dense<0xFF800000> : vector<2x16xf32>
    %154 = vector.multi_reduction <maximumf>, %153, %cst_54 [1] : vector<2x16x16xf32> to vector<2x16xf32>
    %155 = vector.shape_cast %154 : vector<2x16xf32> to vector<2x1x16xf32>
    %156 = vector.broadcast %155 : vector<2x1x16xf32> to vector<2x16x16xf32>
    %157 = arith.subf %153, %156 : vector<2x16x16xf32>
    %158 = math.exp %157 : vector<2x16x16xf32>
    %cst_55 = arith.constant dense<0.000000e+00> : vector<2x16xf32>
    %159 = vector.multi_reduction <add>, %158, %cst_55 [1] : vector<2x16x16xf32> to vector<2x16xf32>
    %160 = vector.shape_cast %159 : vector<2x16xf32> to vector<2x1x16xf32>
    %161 = math.log %160 : vector<2x1x16xf32>
    %162 = arith.addf %161, %155 : vector<2x1x16xf32>
    %cst_56 = arith.constant -9.000000e+00 : f32
    %163 = vector.broadcast %cst_56 : f32 to vector<2x1x16xf32>
    %164 = arith.mulf %163, %162 : vector<2x1x16xf32>
    %165 = arith.addf %125, %147 : vector<2x16x1xf32>
    %cst_57 = arith.constant 5.000000e-01 : f32
    %166 = vector.broadcast %cst_57 : f32 to vector<2x16x1xf32>
    %167 = arith.mulf %166, %165 : vector<2x16x1xf32>
    %168 = arith.addf %128, %164 : vector<2x1x16xf32>
    %cst_58 = arith.constant 5.000000e-01 : f32
    %169 = vector.broadcast %cst_58 : f32 to vector<2x1x16xf32>
    %170 = arith.mulf %169, %168 : vector<2x1x16xf32>
    %cst_59 = arith.constant 0.444444448 : f32
    %171 = vector.broadcast %cst_59 : f32 to vector<2x16x16xf32>
    %172 = arith.mulf %36, %171 : vector<2x16x16xf32>
    %cst_60 = arith.constant 0.444444448 : f32
    %173 = vector.broadcast %cst_60 : f32 to vector<2x1x16xf32>
    %174 = arith.mulf %170, %173 : vector<2x1x16xf32>
    %175 = vector.broadcast %58 : vector<1x1x16xf32> to vector<2x1x16xf32>
    %176 = arith.addf %175, %174 : vector<2x1x16xf32>
    %177 = vector.broadcast %176 : vector<2x1x16xf32> to vector<2x16x16xf32>
    %178 = arith.subf %177, %172 : vector<2x16x16xf32>
    %cst_61 = arith.constant dense<0xFF800000> : vector<2x16xf32>
    %179 = vector.multi_reduction <maximumf>, %178, %cst_61 [2] : vector<2x16x16xf32> to vector<2x16xf32>
    %180 = vector.shape_cast %179 : vector<2x16xf32> to vector<2x16x1xf32>
    %181 = vector.broadcast %180 : vector<2x16x1xf32> to vector<2x16x16xf32>
    %182 = arith.subf %178, %181 : vector<2x16x16xf32>
    %183 = math.exp %182 : vector<2x16x16xf32>
    %cst_62 = arith.constant dense<0.000000e+00> : vector<2x16xf32>
    %184 = vector.multi_reduction <add>, %183, %cst_62 [2] : vector<2x16x16xf32> to vector<2x16xf32>
    %185 = vector.shape_cast %184 : vector<2x16xf32> to vector<2x16x1xf32>
    %186 = math.log %185 : vector<2x16x1xf32>
    %187 = arith.addf %186, %180 : vector<2x16x1xf32>
    %cst_63 = arith.constant -2.250000e+00 : f32
    %188 = vector.broadcast %cst_63 : f32 to vector<2x16x1xf32>
    %189 = arith.mulf %188, %187 : vector<2x16x1xf32>
    %cst_64 = arith.constant 0.444444448 : f32
    %190 = vector.broadcast %cst_64 : f32 to vector<2x16x1xf32>
    %191 = arith.mulf %167, %190 : vector<2x16x1xf32>
    %192 = vector.broadcast %53 : vector<1x16x1xf32> to vector<2x16x1xf32>
    %193 = arith.addf %192, %191 : vector<2x16x1xf32>
    %194 = vector.broadcast %193 : vector<2x16x1xf32> to vector<2x16x16xf32>
    %195 = arith.subf %194, %172 : vector<2x16x16xf32>
    %cst_65 = arith.constant dense<0xFF800000> : vector<2x16xf32>
    %196 = vector.multi_reduction <maximumf>, %195, %cst_65 [1] : vector<2x16x16xf32> to vector<2x16xf32>
    %197 = vector.shape_cast %196 : vector<2x16xf32> to vector<2x1x16xf32>
    %198 = vector.broadcast %197 : vector<2x1x16xf32> to vector<2x16x16xf32>
    %199 = arith.subf %195, %198 : vector<2x16x16xf32>
    %200 = math.exp %199 : vector<2x16x16xf32>
    %cst_66 = arith.constant dense<0.000000e+00> : vector<2x16xf32>
    %201 = vector.multi_reduction <add>, %200, %cst_66 [1] : vector<2x16x16xf32> to vector<2x16xf32>
    %202 = vector.shape_cast %201 : vector<2x16xf32> to vector<2x1x16xf32>
    %203 = math.log %202 : vector<2x1x16xf32>
    %204 = arith.addf %203, %197 : vector<2x1x16xf32>
    %cst_67 = arith.constant -2.250000e+00 : f32
    %205 = vector.broadcast %cst_67 : f32 to vector<2x1x16xf32>
    %206 = arith.mulf %205, %204 : vector<2x1x16xf32>
    %207 = arith.addf %167, %189 : vector<2x16x1xf32>
    %cst_68 = arith.constant 5.000000e-01 : f32
    %208 = vector.broadcast %cst_68 : f32 to vector<2x16x1xf32>
    %209 = arith.mulf %208, %207 : vector<2x16x1xf32>
    %210 = arith.addf %170, %206 : vector<2x1x16xf32>
    %cst_69 = arith.constant 5.000000e-01 : f32
    %211 = vector.broadcast %cst_69 : f32 to vector<2x1x16xf32>
    %212 = arith.mulf %211, %210 : vector<2x1x16xf32>
    %cst_70 = arith.constant 1.77777779 : f32
    %213 = vector.broadcast %cst_70 : f32 to vector<2x16x16xf32>
    %214 = arith.mulf %36, %213 : vector<2x16x16xf32>
    %cst_71 = arith.constant 1.77777779 : f32
    %215 = vector.broadcast %cst_71 : f32 to vector<2x1x16xf32>
    %216 = arith.mulf %212, %215 : vector<2x1x16xf32>
    %217 = vector.broadcast %58 : vector<1x1x16xf32> to vector<2x1x16xf32>
    %218 = arith.addf %217, %216 : vector<2x1x16xf32>
    %219 = vector.broadcast %218 : vector<2x1x16xf32> to vector<2x16x16xf32>
    %220 = arith.subf %219, %214 : vector<2x16x16xf32>
    %cst_72 = arith.constant dense<0xFF800000> : vector<2x16xf32>
    %221 = vector.multi_reduction <maximumf>, %220, %cst_72 [2] : vector<2x16x16xf32> to vector<2x16xf32>
    %222 = vector.shape_cast %221 : vector<2x16xf32> to vector<2x16x1xf32>
    %223 = vector.broadcast %222 : vector<2x16x1xf32> to vector<2x16x16xf32>
    %224 = arith.subf %220, %223 : vector<2x16x16xf32>
    %225 = math.exp %224 : vector<2x16x16xf32>
    %cst_73 = arith.constant dense<0.000000e+00> : vector<2x16xf32>
    %226 = vector.multi_reduction <add>, %225, %cst_73 [2] : vector<2x16x16xf32> to vector<2x16xf32>
    %227 = vector.shape_cast %226 : vector<2x16xf32> to vector<2x16x1xf32>
    %228 = math.log %227 : vector<2x16x1xf32>
    %229 = arith.addf %228, %222 : vector<2x16x1xf32>
    %cst_74 = arith.constant -5.625000e-01 : f32
    %230 = vector.broadcast %cst_74 : f32 to vector<2x16x1xf32>
    %231 = arith.mulf %230, %229 : vector<2x16x1xf32>
    %cst_75 = arith.constant 1.77777779 : f32
    %232 = vector.broadcast %cst_75 : f32 to vector<2x16x1xf32>
    %233 = arith.mulf %209, %232 : vector<2x16x1xf32>
    %234 = vector.broadcast %53 : vector<1x16x1xf32> to vector<2x16x1xf32>
    %235 = arith.addf %234, %233 : vector<2x16x1xf32>
    %236 = vector.broadcast %235 : vector<2x16x1xf32> to vector<2x16x16xf32>
    %237 = arith.subf %236, %214 : vector<2x16x16xf32>
    %cst_76 = arith.constant dense<0xFF800000> : vector<2x16xf32>
    %238 = vector.multi_reduction <maximumf>, %237, %cst_76 [1] : vector<2x16x16xf32> to vector<2x16xf32>
    %239 = vector.shape_cast %238 : vector<2x16xf32> to vector<2x1x16xf32>
    %240 = vector.broadcast %239 : vector<2x1x16xf32> to vector<2x16x16xf32>
    %241 = arith.subf %237, %240 : vector<2x16x16xf32>
    %242 = math.exp %241 : vector<2x16x16xf32>
    %cst_77 = arith.constant dense<0.000000e+00> : vector<2x16xf32>
    %243 = vector.multi_reduction <add>, %242, %cst_77 [1] : vector<2x16x16xf32> to vector<2x16xf32>
    %244 = vector.shape_cast %243 : vector<2x16xf32> to vector<2x1x16xf32>
    %245 = math.log %244 : vector<2x1x16xf32>
    %246 = arith.addf %245, %239 : vector<2x1x16xf32>
    %cst_78 = arith.constant -5.625000e-01 : f32
    %247 = vector.broadcast %cst_78 : f32 to vector<2x1x16xf32>
    %248 = arith.mulf %247, %246 : vector<2x1x16xf32>
    %249 = arith.addf %209, %231 : vector<2x16x1xf32>
    %cst_79 = arith.constant 5.000000e-01 : f32
    %250 = vector.broadcast %cst_79 : f32 to vector<2x16x1xf32>
    %251 = arith.mulf %250, %249 : vector<2x16x1xf32>
    %252 = arith.addf %212, %248 : vector<2x1x16xf32>
    %cst_80 = arith.constant 5.000000e-01 : f32
    %253 = vector.broadcast %cst_80 : f32 to vector<2x1x16xf32>
    %254 = arith.mulf %253, %252 : vector<2x1x16xf32>
    %cst_81 = arith.constant 7.11111116 : f32
    %255 = vector.broadcast %cst_81 : f32 to vector<2x16x16xf32>
    %256 = arith.mulf %36, %255 : vector<2x16x16xf32>
    %cst_82 = arith.constant 7.11111116 : f32
    %257 = vector.broadcast %cst_82 : f32 to vector<2x1x16xf32>
    %258 = arith.mulf %254, %257 : vector<2x1x16xf32>
    %259 = vector.broadcast %58 : vector<1x1x16xf32> to vector<2x1x16xf32>
    %260 = arith.addf %259, %258 : vector<2x1x16xf32>
    %261 = vector.broadcast %260 : vector<2x1x16xf32> to vector<2x16x16xf32>
    %262 = arith.subf %261, %256 : vector<2x16x16xf32>
    %cst_83 = arith.constant dense<0xFF800000> : vector<2x16xf32>
    %263 = vector.multi_reduction <maximumf>, %262, %cst_83 [2] : vector<2x16x16xf32> to vector<2x16xf32>
    %264 = vector.shape_cast %263 : vector<2x16xf32> to vector<2x16x1xf32>
    %265 = vector.broadcast %264 : vector<2x16x1xf32> to vector<2x16x16xf32>
    %266 = arith.subf %262, %265 : vector<2x16x16xf32>
    %267 = math.exp %266 : vector<2x16x16xf32>
    %cst_84 = arith.constant dense<0.000000e+00> : vector<2x16xf32>
    %268 = vector.multi_reduction <add>, %267, %cst_84 [2] : vector<2x16x16xf32> to vector<2x16xf32>
    %269 = vector.shape_cast %268 : vector<2x16xf32> to vector<2x16x1xf32>
    %270 = math.log %269 : vector<2x16x1xf32>
    %271 = arith.addf %270, %264 : vector<2x16x1xf32>
    %cst_85 = arith.constant -1.406250e-01 : f32
    %272 = vector.broadcast %cst_85 : f32 to vector<2x16x1xf32>
    %273 = arith.mulf %272, %271 : vector<2x16x1xf32>
    %cst_86 = arith.constant 7.11111116 : f32
    %274 = vector.broadcast %cst_86 : f32 to vector<2x16x1xf32>
    %275 = arith.mulf %251, %274 : vector<2x16x1xf32>
    %276 = vector.broadcast %53 : vector<1x16x1xf32> to vector<2x16x1xf32>
    %277 = arith.addf %276, %275 : vector<2x16x1xf32>
    %278 = vector.broadcast %277 : vector<2x16x1xf32> to vector<2x16x16xf32>
    %279 = arith.subf %278, %256 : vector<2x16x16xf32>
    %cst_87 = arith.constant dense<0xFF800000> : vector<2x16xf32>
    %280 = vector.multi_reduction <maximumf>, %279, %cst_87 [1] : vector<2x16x16xf32> to vector<2x16xf32>
    %281 = vector.shape_cast %280 : vector<2x16xf32> to vector<2x1x16xf32>
    %282 = vector.broadcast %281 : vector<2x1x16xf32> to vector<2x16x16xf32>
    %283 = arith.subf %279, %282 : vector<2x16x16xf32>
    %284 = math.exp %283 : vector<2x16x16xf32>
    %cst_88 = arith.constant dense<0.000000e+00> : vector<2x16xf32>
    %285 = vector.multi_reduction <add>, %284, %cst_88 [1] : vector<2x16x16xf32> to vector<2x16xf32>
    %286 = vector.shape_cast %285 : vector<2x16xf32> to vector<2x1x16xf32>
    %287 = math.log %286 : vector<2x1x16xf32>
    %288 = arith.addf %287, %281 : vector<2x1x16xf32>
    %cst_89 = arith.constant -1.406250e-01 : f32
    %289 = vector.broadcast %cst_89 : f32 to vector<2x1x16xf32>
    %290 = arith.mulf %289, %288 : vector<2x1x16xf32>
    %291 = arith.addf %251, %273 : vector<2x16x1xf32>
    %cst_90 = arith.constant 5.000000e-01 : f32
    %292 = vector.broadcast %cst_90 : f32 to vector<2x16x1xf32>
    %293 = arith.mulf %292, %291 : vector<2x16x1xf32>
    %294 = arith.addf %254, %290 : vector<2x1x16xf32>
    %cst_91 = arith.constant 5.000000e-01 : f32
    %295 = vector.broadcast %cst_91 : f32 to vector<2x1x16xf32>
    %296 = arith.mulf %295, %294 : vector<2x1x16xf32>
    %cst_92 = arith.constant 28.4444447 : f32
    %297 = vector.broadcast %cst_92 : f32 to vector<2x16x16xf32>
    %298 = arith.mulf %36, %297 : vector<2x16x16xf32>
    %cst_93 = arith.constant 28.4444447 : f32
    %299 = vector.broadcast %cst_93 : f32 to vector<2x1x16xf32>
    %300 = arith.mulf %296, %299 : vector<2x1x16xf32>
    %301 = vector.broadcast %58 : vector<1x1x16xf32> to vector<2x1x16xf32>
    %302 = arith.addf %301, %300 : vector<2x1x16xf32>
    %303 = vector.broadcast %302 : vector<2x1x16xf32> to vector<2x16x16xf32>
    %304 = arith.subf %303, %298 : vector<2x16x16xf32>
    %cst_94 = arith.constant dense<0xFF800000> : vector<2x16xf32>
    %305 = vector.multi_reduction <maximumf>, %304, %cst_94 [2] : vector<2x16x16xf32> to vector<2x16xf32>
    %306 = vector.shape_cast %305 : vector<2x16xf32> to vector<2x16x1xf32>
    %307 = vector.broadcast %306 : vector<2x16x1xf32> to vector<2x16x16xf32>
    %308 = arith.subf %304, %307 : vector<2x16x16xf32>
    %309 = math.exp %308 : vector<2x16x16xf32>
    %cst_95 = arith.constant dense<0.000000e+00> : vector<2x16xf32>
    %310 = vector.multi_reduction <add>, %309, %cst_95 [2] : vector<2x16x16xf32> to vector<2x16xf32>
    %311 = vector.shape_cast %310 : vector<2x16xf32> to vector<2x16x1xf32>
    %312 = math.log %311 : vector<2x16x1xf32>
    %313 = arith.addf %312, %306 : vector<2x16x1xf32>
    %cst_96 = arith.constant -0.03515625 : f32
    %314 = vector.broadcast %cst_96 : f32 to vector<2x16x1xf32>
    %315 = arith.mulf %314, %313 : vector<2x16x1xf32>
    %cst_97 = arith.constant 28.4444447 : f32
    %316 = vector.broadcast %cst_97 : f32 to vector<2x16x1xf32>
    %317 = arith.mulf %293, %316 : vector<2x16x1xf32>
    %318 = vector.broadcast %53 : vector<1x16x1xf32> to vector<2x16x1xf32>
    %319 = arith.addf %318, %317 : vector<2x16x1xf32>
    %320 = vector.broadcast %319 : vector<2x16x1xf32> to vector<2x16x16xf32>
    %321 = arith.subf %320, %298 : vector<2x16x16xf32>
    %cst_98 = arith.constant dense<0xFF800000> : vector<2x16xf32>
    %322 = vector.multi_reduction <maximumf>, %321, %cst_98 [1] : vector<2x16x16xf32> to vector<2x16xf32>
    %323 = vector.shape_cast %322 : vector<2x16xf32> to vector<2x1x16xf32>
    %324 = vector.broadcast %323 : vector<2x1x16xf32> to vector<2x16x16xf32>
    %325 = arith.subf %321, %324 : vector<2x16x16xf32>
    %326 = math.exp %325 : vector<2x16x16xf32>
    %cst_99 = arith.constant dense<0.000000e+00> : vector<2x16xf32>
    %327 = vector.multi_reduction <add>, %326, %cst_99 [1] : vector<2x16x16xf32> to vector<2x16xf32>
    %328 = vector.shape_cast %327 : vector<2x16xf32> to vector<2x1x16xf32>
    %329 = math.log %328 : vector<2x1x16xf32>
    %330 = arith.addf %329, %323 : vector<2x1x16xf32>
    %cst_100 = arith.constant -0.03515625 : f32
    %331 = vector.broadcast %cst_100 : f32 to vector<2x1x16xf32>
    %332 = arith.mulf %331, %330 : vector<2x1x16xf32>
    %333 = arith.addf %293, %315 : vector<2x16x1xf32>
    %cst_101 = arith.constant 5.000000e-01 : f32
    %334 = vector.broadcast %cst_101 : f32 to vector<2x16x1xf32>
    %335 = arith.mulf %334, %333 : vector<2x16x1xf32>
    %336 = arith.addf %296, %332 : vector<2x1x16xf32>
    %cst_102 = arith.constant 5.000000e-01 : f32
    %337 = vector.broadcast %cst_102 : f32 to vector<2x1x16xf32>
    %338 = arith.mulf %337, %336 : vector<2x1x16xf32>
    %cst_103 = arith.constant 113.777779 : f32
    %339 = vector.broadcast %cst_103 : f32 to vector<2x16x16xf32>
    %340 = arith.mulf %36, %339 : vector<2x16x16xf32>
    %cst_104 = arith.constant 113.777779 : f32
    %341 = vector.broadcast %cst_104 : f32 to vector<2x1x16xf32>
    %342 = arith.mulf %338, %341 : vector<2x1x16xf32>
    %343 = vector.broadcast %58 : vector<1x1x16xf32> to vector<2x1x16xf32>
    %344 = arith.addf %343, %342 : vector<2x1x16xf32>
    %345 = vector.broadcast %344 : vector<2x1x16xf32> to vector<2x16x16xf32>
    %346 = arith.subf %345, %340 : vector<2x16x16xf32>
    %cst_105 = arith.constant dense<0xFF800000> : vector<2x16xf32>
    %347 = vector.multi_reduction <maximumf>, %346, %cst_105 [2] : vector<2x16x16xf32> to vector<2x16xf32>
    %348 = vector.shape_cast %347 : vector<2x16xf32> to vector<2x16x1xf32>
    %349 = vector.broadcast %348 : vector<2x16x1xf32> to vector<2x16x16xf32>
    %350 = arith.subf %346, %349 : vector<2x16x16xf32>
    %351 = math.exp %350 : vector<2x16x16xf32>
    %cst_106 = arith.constant dense<0.000000e+00> : vector<2x16xf32>
    %352 = vector.multi_reduction <add>, %351, %cst_106 [2] : vector<2x16x16xf32> to vector<2x16xf32>
    %353 = vector.shape_cast %352 : vector<2x16xf32> to vector<2x16x1xf32>
    %354 = math.log %353 : vector<2x16x1xf32>
    %355 = arith.addf %354, %348 : vector<2x16x1xf32>
    %cst_107 = arith.constant -0.0087890625 : f32
    %356 = vector.broadcast %cst_107 : f32 to vector<2x16x1xf32>
    %357 = arith.mulf %356, %355 : vector<2x16x1xf32>
    %cst_108 = arith.constant 113.777779 : f32
    %358 = vector.broadcast %cst_108 : f32 to vector<2x16x1xf32>
    %359 = arith.mulf %335, %358 : vector<2x16x1xf32>
    %360 = vector.broadcast %53 : vector<1x16x1xf32> to vector<2x16x1xf32>
    %361 = arith.addf %360, %359 : vector<2x16x1xf32>
    %362 = vector.broadcast %361 : vector<2x16x1xf32> to vector<2x16x16xf32>
    %363 = arith.subf %362, %340 : vector<2x16x16xf32>
    %cst_109 = arith.constant dense<0xFF800000> : vector<2x16xf32>
    %364 = vector.multi_reduction <maximumf>, %363, %cst_109 [1] : vector<2x16x16xf32> to vector<2x16xf32>
    %365 = vector.shape_cast %364 : vector<2x16xf32> to vector<2x1x16xf32>
    %366 = vector.broadcast %365 : vector<2x1x16xf32> to vector<2x16x16xf32>
    %367 = arith.subf %363, %366 : vector<2x16x16xf32>
    %368 = math.exp %367 : vector<2x16x16xf32>
    %cst_110 = arith.constant dense<0.000000e+00> : vector<2x16xf32>
    %369 = vector.multi_reduction <add>, %368, %cst_110 [1] : vector<2x16x16xf32> to vector<2x16xf32>
    %370 = vector.shape_cast %369 : vector<2x16xf32> to vector<2x1x16xf32>
    %371 = math.log %370 : vector<2x1x16xf32>
    %372 = arith.addf %371, %365 : vector<2x1x16xf32>
    %cst_111 = arith.constant -0.0087890625 : f32
    %373 = vector.broadcast %cst_111 : f32 to vector<2x1x16xf32>
    %374 = arith.mulf %373, %372 : vector<2x1x16xf32>
    %375 = arith.addf %335, %357 : vector<2x16x1xf32>
    %cst_112 = arith.constant 5.000000e-01 : f32
    %376 = vector.broadcast %cst_112 : f32 to vector<2x16x1xf32>
    %377 = arith.mulf %376, %375 : vector<2x16x1xf32>
    %378 = arith.addf %338, %374 : vector<2x1x16xf32>
    %cst_113 = arith.constant 5.000000e-01 : f32
    %379 = vector.broadcast %cst_113 : f32 to vector<2x1x16xf32>
    %380 = arith.mulf %379, %378 : vector<2x1x16xf32>
    %cst_114 = arith.constant 4.000000e+02 : f32
    %381 = vector.broadcast %cst_114 : f32 to vector<2x16x16xf32>
    %382 = arith.mulf %36, %381 : vector<2x16x16xf32>
    %cst_115 = arith.constant 4.000000e+02 : f32
    %383 = vector.broadcast %cst_115 : f32 to vector<2x1x16xf32>
    %384 = arith.mulf %380, %383 : vector<2x1x16xf32>
    %385 = vector.broadcast %58 : vector<1x1x16xf32> to vector<2x1x16xf32>
    %386 = arith.addf %385, %384 : vector<2x1x16xf32>
    %387 = vector.broadcast %386 : vector<2x1x16xf32> to vector<2x16x16xf32>
    %388 = arith.subf %387, %382 : vector<2x16x16xf32>
    %cst_116 = arith.constant dense<0xFF800000> : vector<2x16xf32>
    %389 = vector.multi_reduction <maximumf>, %388, %cst_116 [2] : vector<2x16x16xf32> to vector<2x16xf32>
    %390 = vector.shape_cast %389 : vector<2x16xf32> to vector<2x16x1xf32>
    %391 = vector.broadcast %390 : vector<2x16x1xf32> to vector<2x16x16xf32>
    %392 = arith.subf %388, %391 : vector<2x16x16xf32>
    %393 = math.exp %392 : vector<2x16x16xf32>
    %cst_117 = arith.constant dense<0.000000e+00> : vector<2x16xf32>
    %394 = vector.multi_reduction <add>, %393, %cst_117 [2] : vector<2x16x16xf32> to vector<2x16xf32>
    %395 = vector.shape_cast %394 : vector<2x16xf32> to vector<2x16x1xf32>
    %396 = math.log %395 : vector<2x16x1xf32>
    %397 = arith.addf %396, %390 : vector<2x16x1xf32>
    %cst_118 = arith.constant -2.500000e-03 : f32
    %398 = vector.broadcast %cst_118 : f32 to vector<2x16x1xf32>
    %399 = arith.mulf %398, %397 : vector<2x16x1xf32>
    %cst_119 = arith.constant 4.000000e+02 : f32
    %400 = vector.broadcast %cst_119 : f32 to vector<2x16x1xf32>
    %401 = arith.mulf %377, %400 : vector<2x16x1xf32>
    %402 = vector.broadcast %53 : vector<1x16x1xf32> to vector<2x16x1xf32>
    %403 = arith.addf %402, %401 : vector<2x16x1xf32>
    %404 = vector.broadcast %403 : vector<2x16x1xf32> to vector<2x16x16xf32>
    %405 = arith.subf %404, %382 : vector<2x16x16xf32>
    %cst_120 = arith.constant dense<0xFF800000> : vector<2x16xf32>
    %406 = vector.multi_reduction <maximumf>, %405, %cst_120 [1] : vector<2x16x16xf32> to vector<2x16xf32>
    %407 = vector.shape_cast %406 : vector<2x16xf32> to vector<2x1x16xf32>
    %408 = vector.broadcast %407 : vector<2x1x16xf32> to vector<2x16x16xf32>
    %409 = arith.subf %405, %408 : vector<2x16x16xf32>
    %410 = math.exp %409 : vector<2x16x16xf32>
    %cst_121 = arith.constant dense<0.000000e+00> : vector<2x16xf32>
    %411 = vector.multi_reduction <add>, %410, %cst_121 [1] : vector<2x16x16xf32> to vector<2x16xf32>
    %412 = vector.shape_cast %411 : vector<2x16xf32> to vector<2x1x16xf32>
    %413 = math.log %412 : vector<2x1x16xf32>
    %414 = arith.addf %413, %407 : vector<2x1x16xf32>
    %cst_122 = arith.constant -2.500000e-03 : f32
    %415 = vector.broadcast %cst_122 : f32 to vector<2x1x16xf32>
    %416 = arith.mulf %415, %414 : vector<2x1x16xf32>
    %417 = arith.addf %377, %399 : vector<2x16x1xf32>
    %cst_123 = arith.constant 5.000000e-01 : f32
    %418 = vector.broadcast %cst_123 : f32 to vector<2x16x1xf32>
    %419 = arith.mulf %418, %417 : vector<2x16x1xf32>
    %420 = arith.addf %380, %416 : vector<2x1x16xf32>
    %cst_124 = arith.constant 5.000000e-01 : f32
    %421 = vector.broadcast %cst_124 : f32 to vector<2x1x16xf32>
    %422 = arith.mulf %421, %420 : vector<2x1x16xf32>
    %cst_125 = arith.constant 4.000000e+02 : f32
    %423 = vector.broadcast %cst_125 : f32 to vector<2x1x16xf32>
    %424 = arith.mulf %422, %423 : vector<2x1x16xf32>
    %425 = vector.broadcast %58 : vector<1x1x16xf32> to vector<2x1x16xf32>
    %426 = arith.addf %425, %424 : vector<2x1x16xf32>
    %427 = vector.broadcast %426 : vector<2x1x16xf32> to vector<2x16x16xf32>
    %428 = arith.subf %427, %382 : vector<2x16x16xf32>
    %cst_126 = arith.constant dense<0xFF800000> : vector<2x16xf32>
    %429 = vector.multi_reduction <maximumf>, %428, %cst_126 [2] : vector<2x16x16xf32> to vector<2x16xf32>
    %430 = vector.shape_cast %429 : vector<2x16xf32> to vector<2x16x1xf32>
    %431 = vector.broadcast %430 : vector<2x16x1xf32> to vector<2x16x16xf32>
    %432 = arith.subf %428, %431 : vector<2x16x16xf32>
    %433 = math.exp %432 : vector<2x16x16xf32>
    %cst_127 = arith.constant dense<0.000000e+00> : vector<2x16xf32>
    %434 = vector.multi_reduction <add>, %433, %cst_127 [2] : vector<2x16x16xf32> to vector<2x16xf32>
    %435 = vector.shape_cast %434 : vector<2x16xf32> to vector<2x16x1xf32>
    %436 = math.log %435 : vector<2x16x1xf32>
    %437 = arith.addf %436, %430 : vector<2x16x1xf32>
    %cst_128 = arith.constant -2.500000e-03 : f32
    %438 = vector.broadcast %cst_128 : f32 to vector<2x16x1xf32>
    %439 = arith.mulf %438, %437 : vector<2x16x1xf32>
    %cst_129 = arith.constant 4.000000e+02 : f32
    %440 = vector.broadcast %cst_129 : f32 to vector<2x16x1xf32>
    %441 = arith.mulf %419, %440 : vector<2x16x1xf32>
    %442 = vector.broadcast %53 : vector<1x16x1xf32> to vector<2x16x1xf32>
    %443 = arith.addf %442, %441 : vector<2x16x1xf32>
    %444 = vector.broadcast %443 : vector<2x16x1xf32> to vector<2x16x16xf32>
    %445 = arith.subf %444, %382 : vector<2x16x16xf32>
    %cst_130 = arith.constant dense<0xFF800000> : vector<2x16xf32>
    %446 = vector.multi_reduction <maximumf>, %445, %cst_130 [1] : vector<2x16x16xf32> to vector<2x16xf32>
    %447 = vector.shape_cast %446 : vector<2x16xf32> to vector<2x1x16xf32>
    %448 = vector.broadcast %447 : vector<2x1x16xf32> to vector<2x16x16xf32>
    %449 = arith.subf %445, %448 : vector<2x16x16xf32>
    %450 = math.exp %449 : vector<2x16x16xf32>
    %cst_131 = arith.constant dense<0.000000e+00> : vector<2x16xf32>
    %451 = vector.multi_reduction <add>, %450, %cst_131 [1] : vector<2x16x16xf32> to vector<2x16xf32>
    %452 = vector.shape_cast %451 : vector<2x16xf32> to vector<2x1x16xf32>
    %453 = math.log %452 : vector<2x1x16xf32>
    %454 = arith.addf %453, %447 : vector<2x1x16xf32>
    %cst_132 = arith.constant -2.500000e-03 : f32
    %455 = vector.broadcast %cst_132 : f32 to vector<2x1x16xf32>
    %456 = arith.mulf %455, %454 : vector<2x1x16xf32>
    %457 = vector.broadcast %43 : vector<1x16x1xf32> to vector<2x16x1xf32>
    %458 = arith.mulf %457, %439 : vector<2x16x1xf32>
    %cst_133 = arith.constant dense<0.000000e+00> : vector<2x1xf32>
    %459 = vector.multi_reduction <add>, %458, %cst_133 [1] : vector<2x16x1xf32> to vector<2x1xf32>
    %460 = vector.shape_cast %459 : vector<2x1xf32> to vector<2x1x1xf32>
    %461 = vector.broadcast %48 : vector<1x1x16xf32> to vector<2x1x16xf32>
    %462 = arith.mulf %461, %456 : vector<2x1x16xf32>
    %cst_134 = arith.constant dense<0.000000e+00> : vector<2x1xf32>
    %463 = vector.multi_reduction <add>, %462, %cst_134 [2] : vector<2x1x16xf32> to vector<2x1xf32>
    %464 = vector.shape_cast %463 : vector<2x1xf32> to vector<2x1x1xf32>
    %465 = arith.addf %460, %464 : vector<2x1x1xf32>
    %c0_135 = arith.constant 0 : index
    %c0_136 = arith.constant 0 : index
    %c0_137 = arith.constant 0 : index
    %466 = vector.load %arg5[%c0_135, %c0_136, %c0_137] : memref<2x1x1xf32, #tpu.memory_space<vmem>>, vector<2x1x1xf32>
    tpu.vector_store %arg5[%c0_135, %c0_136, %c0_137], %465 {strides = array<i32>} : memref<2x1x1xf32, #tpu.memory_space<vmem>>, vector<2x1x1xf32>,
    "tpu.trace_start"() <{level = 10 : i32, message = "bnd,bmd->bnm"}> : () -> ()
    %cst_138 = arith.constant dense<0.000000e+00> : vector<2x8x8xf32>
    %467 = tpu.matmul %2, %3, %cst_138 {dimension_numbers = #tpu.dot_dimension_numbers<[2], [2], [1], [1], [0, 0, 0, 1, 1, 1], [0], [0]>} : vector<2x8x32xf32>, vector<2x8x32xf32>, vector<2x8x8xf32> -> vector<2x8x8xf32>
    "tpu.trace_stop"() : () -> ()
    %cst_139 = arith.constant 1.000000e-01 : f32
    %468 = vector.broadcast %cst_139 : f32 to vector<2x8x8xf32>
    %469 = arith.subf %468, %467 : vector<2x8x8xf32>
    %cst_140 = arith.constant 0.000000e+00 : f32
    %470 = vector.broadcast %cst_140 : f32 to vector<2x8x8xf32>
    %471 = arith.maximumf %469, %470 : vector<2x8x8xf32>
    %cst_141 = arith.constant dense<0.000000e+00> : vector<2x8xf32>
    %472 = vector.multi_reduction <add>, %471, %cst_141 [2] : vector<2x8x8xf32> to vector<2x8xf32>
    %473 = vector.shape_cast %472 : vector<2x8xf32> to vector<2x8x1xf32>
    %cst_142 = arith.constant dense<0.000000e+00> : vector<2x1xf32>
    %474 = vector.multi_reduction <add>, %473, %cst_142 [1] : vector<2x8x1xf32> to vector<2x1xf32>
    %475 = vector.shape_cast %474 : vector<2x1xf32> to vector<2x1x1xf32>
    %c0_143 = arith.constant 0 : index
    %c0_144 = arith.constant 0 : index
    %c0_145 = arith.constant 0 : index
    %476 = vector.load %arg6[%c0_143, %c0_144, %c0_145] : memref<2x1x1xf32, #tpu.memory_space<vmem>>, vector<2x1x1xf32>
    tpu.vector_store %arg6[%c0_143, %c0_144, %c0_145], %475 {strides = array<i32>} : memref<2x1x1xf32, #tpu.memory_space<vmem>>, vector<2x1x1xf32>,
    return
  }
  func.func @transform_0(%arg0: i32) -> (i32, i32, i32) {
    %c0_i32 = arith.constant 0 : i32
    %c0_i32_0 = arith.constant 0 : i32
    %c0_i32_1 = arith.constant 0 : i32
    return %arg0, %c0_i32, %c0_i32_0 : i32, i32, i32
  }
  func.func @transform_1(%arg0: i32) -> (i32, i32, i32) {
    %c0_i32 = arith.constant 0 : i32
    %c0_i32_0 = arith.constant 0 : i32
    %c0_i32_1 = arith.constant 0 : i32
    return %arg0, %c0_i32, %c0_i32_0 : i32, i32, i32
  }
  func.func @transform_2(%arg0: i32) -> (i32, i32, i32) {
    %c0_i32 = arith.constant 0 : i32
    %c0_i32_0 = arith.constant 0 : i32
    %c0_i32_1 = arith.constant 0 : i32
    return %arg0, %c0_i32, %c0_i32_0 : i32, i32, i32
  }
  func.func @transform_3(%arg0: i32) -> (i32, i32, i32) {
    %c0_i32 = arith.constant 0 : i32
    %c0_i32_0 = arith.constant 0 : i32
    %c0_i32_1 = arith.constant 0 : i32
    return %arg0, %c0_i32, %c0_i32_0 : i32, i32, i32
  }
  func.func @transform_4(%arg0: i32) -> (i32, i32, i32) {
    %c0_i32 = arith.constant 0 : i32
    %c0_i32_0 = arith.constant 0 : i32
    %c0_i32_1 = arith.constant 0 : i32
    return %arg0, %c0_i32, %c0_i32_0 : i32, i32, i32
  }
  func.func @transform_5(%arg0: i32) -> (i32, i32, i32) {
    %c0_i32 = arith.constant 0 : i32
    %c0_i32_0 = arith.constant 0 : i32
    %c0_i32_1 = arith.constant 0 : i32
    return %arg0, %c0_i32, %c0_i32_0 : i32, i32, i32
  }
}

</mosaic_0001>

<llo_original>
// kernel: gml_forward.1
$region0: #{gml_forward.1}
  #allocation0 [shape = 'u32[]', space=smem, size = 0x4, offset = 0x4, fixed_abs, tag = 'smem constant byte address 0x4 - core index']
  #allocation1 [shape = 'u32[144,128]{1,0:T(1,128)}', space=vmem, size = 0x12000, scoped, tag = 'internal scratch']
  %s0 = inlined_call_operand.hbm [shape: f32[2,8,32], index: 0, kind: input, shape index: {}]
  %s1 = inlined_call_operand.hbm [shape: f32[2,8,32], index: 1, kind: input, shape index: {}]
  %s2 = inlined_call_operand.hbm [shape: f32[2,8,32], index: 2, kind: input, shape index: {}]
  %s3 = inlined_call_operand.hbm [shape: f32[2,8,32], index: 3, kind: input, shape index: {}]
  %s4 = inlined_call_operand.vmem [shape: f32[2,1,1], index: 4, kind: output, shape index: {0}]
  %s5 = inlined_call_operand.vmem [shape: f32[2,1,1], index: 5, kind: output, shape index: {1}]
  %6 = xla_tuple %s4, %s5
  %s7 = sld [smem:[#allocation0]]
  $region50: #{gml_forward.1} parent=0
    _
  %s9 = ssub.s32 1, %s7
  %s10 = scalar_select 0, %s9, %s7
  $region1: #{gml_forward.1} parent=0
    #allocation2 [shape = 'u8[8192]{0}', space=vmem, size = 0x2000, scoped, tag = 'input window, operand 0, single buffered']
    #allocation3 [shape = 's32[1]{0}', space=sflag, size = 0x4, scoped, tag = 'scoped memory for gml_forward.1']
    #allocation4 [shape = 'u8[8192]{0}', space=vmem, size = 0x2000, scoped, tag = 'input window, operand 1, single buffered']
    #allocation5 [shape = 's32[1]{0}', space=sflag, size = 0x4, scoped, tag = 'scoped memory for gml_forward.1']
    #allocation6 [shape = 'u8[8192]{0}', space=vmem, size = 0x2000, scoped, tag = 'input window, operand 2, single buffered']
    #allocation7 [shape = 'u8[8192]{0}', space=vmem, size = 0x2000, scoped, tag = 'input window, operand 3, single buffered']
    #allocation8 [shape = 's32[1]{0}', space=sflag, size = 0x4, scoped, tag = 'scoped memory for gml_forward.1']
    %11 = vsyncpa [#allocation3], 0
    %12 = vsyncpa [#allocation5], 0
    %13 = vsyncpa [#allocation8], 0
    // Predicated region
    $region2: #{gml_forward.1} parent=1 // pred_check
      _
    $region3: #{gml_forward.1} parent=1 // pred_check_branch
      %15 = sbr.rel (0) target = $region5
    $region4: #{gml_forward.1} parent=1 // pred_region
      %s17 = ssub.s32 256, 256
      %18 = vsyncadd [#allocation3], %s17
      %s19 = sshll.u32 [#allocation2], 4
      %s20 = int_to_ptr.vmem [resolvable:$true] %s19
      %25 = dma.hbm_to_vmem [thread:$0]  %s0, 256, %s20, [#allocation3], 128, 128, 8
    $region5: #{gml_forward.1} parent=1 // pred_fallthru
      _
    // Predicated region
    $region6: #{gml_forward.1} parent=1 // pred_check
      _
    $region7: #{gml_forward.1} parent=1 // pred_check_branch
      %27 = sbr.rel (0) target = $region9
    $region8: #{gml_forward.1} parent=1 // pred_region
      %s29 = ssub.s32 256, 256
      %30 = vsyncadd [#allocation5], %s29
      %s31 = sshll.u32 [#allocation4], 4
      %s32 = int_to_ptr.vmem [resolvable:$true] %s31
      %37 = dma.hbm_to_vmem [thread:$0]  %s1, 256, %s32, [#allocation5], 128, 128, 8
    $region9: #{gml_forward.1} parent=1 // pred_fallthru
      _
    // Predicated region
    $region10: #{gml_forward.1} parent=1 // pred_check
      _
    $region11: #{gml_forward.1} parent=1 // pred_check_branch
      %39 = sbr.rel (0) target = $region13
    $region12: #{gml_forward.1} parent=1 // pred_region
      %s41 = ssub.s32 256, 256
      %42 = vsyncadd [#allocation5], %s41
      %s43 = sshll.u32 [#allocation6], 4
      %s44 = int_to_ptr.vmem [resolvable:$true] %s43
      %49 = dma.hbm_to_vmem [thread:$0]  %s2, 256, %s44, [#allocation5], 128, 128, 8
    $region13: #{gml_forward.1} parent=1 // pred_fallthru
      _
    // Predicated region
    $region14: #{gml_forward.1} parent=1 // pred_check
      _
    $region15: #{gml_forward.1} parent=1 // pred_check_branch
      %51 = sbr.rel (0) target = $region17
    $region16: #{gml_forward.1} parent=1 // pred_region
      %s53 = ssub.s32 256, 256
      %54 = vsyncadd [#allocation8], %s53
      %s55 = sshll.u32 [#allocation7], 4
      %s56 = int_to_ptr.vmem [resolvable:$true] %s55
      %61 = dma.hbm_to_vmem [thread:$0]  %s3, 256, %s56, [#allocation8], 128, 128, 8
    $region17: #{gml_forward.1} parent=1 // pred_fallthru
      _
    // Predicated region
    $region18: #{gml_forward.1} parent=1 // pred_check
      _
    $region19: #{gml_forward.1} parent=1 // pred_check_branch
      %63 = sbr.rel (0) target = $region21
    $region20: #{gml_forward.1} parent=1 // pred_region
      %64 = dma.done [#allocation3], 256
    $region21: #{gml_forward.1} parent=1 // pred_fallthru
      _
    // Predicated region
    $region22: #{gml_forward.1} parent=1 // pred_check
      _
    $region23: #{gml_forward.1} parent=1 // pred_check_branch
      %66 = sbr.rel (0) target = $region25
    $region24: #{gml_forward.1} parent=1 // pred_region
      %67 = dma.done [#allocation5], 256
    $region25: #{gml_forward.1} parent=1 // pred_fallthru
      _
    // Predicated region
    $region26: #{gml_forward.1} parent=1 // pred_check
      _
    $region27: #{gml_forward.1} parent=1 // pred_check_branch
      %69 = sbr.rel (0) target = $region29
    $region28: #{gml_forward.1} parent=1 // pred_region
      %70 = dma.done [#allocation5], 256
    $region29: #{gml_forward.1} parent=1 // pred_fallthru
      _
    // Predicated region
    $region30: #{gml_forward.1} parent=1 // pred_check
      _
    $region31: #{gml_forward.1} parent=1 // pred_check_branch
      %72 = sbr.rel (0) target = $region33
    $region32: #{gml_forward.1} parent=1 // pred_region
      %73 = dma.done [#allocation8], 256
    $region33: #{gml_forward.1} parent=1 // pred_fallthru
      _
    %v74 = vld [vmem:[#allocation2] sm:$0xff]
    %v75 = vld [vmem:[#allocation2 + $0x8] sm:$0xff]
    %v76 = vld [vmem:[#allocation4] sm:$0xff]
    %v77 = vld [vmem:[#allocation4 + $0x8] sm:$0xff]
    %v78 = vld [vmem:[#allocation6] sm:$0xff]
    %v79 = vld [vmem:[#allocation6 + $0x8] sm:$0xff]
    %v80 = vld [vmem:[#allocation7] sm:$0xff]
    %v81 = vld [vmem:[#allocation7 + $0x8] sm:$0xff]
    %v82 = vmul.f32 %v74, %v74
    %v83 = vmul.f32 %v78, %v78
    %v84 = vmul.f32 %v75, %v75
    %v85 = vmul.f32 %v79, %v79
    %vm86 = vcmask 261120
    %v87 = vsel %vm86, %v82, 0.0
    %88 = vadd.xlane.f32.xlu0 %v87
    %v89 = vpop.xlane.xlu0 %88
    %v90 = vsel %vm86, %v83, 0.0
    %91 = vadd.xlane.f32.xlu0 %v90
    %v92 = vpop.xlane.xlu0 %91
    %v93 = vsel %vm86, %v84, 0.0
    %94 = vadd.xlane.f32.xlu0 %v93
    %v95 = vpop.xlane.xlu0 %94
    %v96 = vsel %vm86, %v85, 0.0
    %97 = vadd.xlane.f32.xlu0 %v96
    %v98 = vpop.xlane.xlu0 %97
    %v99 = vmax.f32 %v89, 1e-24
    %v100 = vmax.f32 %v92, 1e-24
    %v101 = vmax.f32 %v95, 1e-24
    %v102 = vmax.f32 %v98, 1e-24
    %v103 = vrsqrt.pop %v99
    %v104 = vrsqrt.pop %v100
    %v105 = vrsqrt.pop %v101
    %v106 = vrsqrt.pop %v102
    %v107 = vmul.f32 %v76, %v76
    %v108 = vmul.f32 %v80, %v80
    %v109 = vmul.f32 %v77, %v77
    %v110 = vmul.f32 %v81, %v81
    %v111 = vsel %vm86, %v107, 0.0
    %112 = vadd.xlane.f32.xlu0 %v111
    %v113 = vpop.xlane.xlu0 %112
    %v114 = vsel %vm86, %v108, 0.0
    %115 = vadd.xlane.f32.xlu0 %v114
    %v116 = vpop.xlane.xlu0 %115
    %v117 = vsel %vm86, %v109, 0.0
    %118 = vadd.xlane.f32.xlu0 %v117
    %v119 = vpop.xlane.xlu0 %118
    %v120 = vsel %vm86, %v110, 0.0
    %121 = vadd.xlane.f32.xlu0 %v120
    %v122 = vpop.xlane.xlu0 %121
    %v123 = vmax.f32 %v113, 1e-24
    %v124 = vmax.f32 %v116, 1e-24
    %v125 = vmax.f32 %v119, 1e-24
    %v126 = vmax.f32 %v122, 1e-24
    %v127 = vrsqrt.pop %v123
    %v128 = vrsqrt.pop %v124
    %v129 = vrsqrt.pop %v125
    %v130 = vrsqrt.pop %v126
    %v131 = vmul.f32 %v74, %v103
    %v132 = vmul.f32 %v78, %v104
    %v133 = vmul.f32 %v75, %v105
    %v134 = vmul.f32 %v79, %v106
    %v135 = vmul.f32 %v76, %v127
    %v136 = vmul.f32 %v80, %v128
    %v137 = vmul.f32 %v77, %v129
    %v138 = vmul.f32 %v81, %v130
    %v140 = vsel %vm86, %v131, 0
    %v143 = vsel %vm86, %v132, 0
    %v146 = vsel %vm86, %v135, 0
    %v149 = vsel %vm86, %v136, 0
    %151 = vmatprep.subr.mxu0 0.0
    %152 = vmatpush1.xpose.msra.mxu0 %v146
    %153 = vmatprep.subr.mxu0 0.0
    %154 = vmatpush1.xpose.msra.mxu0 %v149
    %155 = vmatprep.subr.mxu0 0.0
    %156 = vmatpush1.xpose.msra.mxu0 0.0
    %157 = vmatprep.subr.mxu0 0.0
    %158 = vmatpush1.xpose.msra.mxu0 0.0
    %159 = vmatprep.subr.mxu0 0.0
    %160 = vmatpush1.xpose.msra.mxu0 0.0
    %161 = vmatprep.subr.mxu0 0.0
    %162 = vmatpush1.xpose.msra.mxu0 0.0
    %163 = vmatprep.subr.mxu0 0.0
    %164 = vmatpush1.xpose.msra.mxu0 0.0
    %165 = vmatprep.subr.mxu0 0.0
    %166 = vmatpush1.xpose.msra.mxu0 0.0
    %167 = vmatprep.subr.mxu0 0.0
    %168 = vmatpush1.xpose.msra.mxu0 0.0
    %169 = vmatprep.subr.mxu0 0.0
    %170 = vmatpush1.xpose.msra.mxu0 0.0
    %171 = vmatprep.subr.mxu0 0.0
    %172 = vmatpush1.xpose.msra.mxu0 0.0
    %173 = vmatprep.subr.mxu0 0.0
    %174 = vmatpush1.xpose.msra.mxu0 0.0
    %175 = vmatprep.subr.mxu0 0.0
    %176 = vmatpush1.xpose.msra.mxu0 0.0
    %177 = vmatprep.subr.mxu0 0.0
    %178 = vmatpush1.xpose.msra.mxu0 0.0
    %179 = vmatprep.subr.mxu0 0.0
    %180 = vmatpush1.xpose.msra.mxu0 0.0
    %181 = vmatprep.subr.mxu0 0.0
    %182 = vmatpush1.xpose.msra.mxu0 0.0
    %183 = vmatprep.subr.mxu0 0.0
    %184 = vmatpush1.xpose.msra.mxu0 0.0
    %185 = vmatprep.subr.mxu0 0.0
    %186 = vmatpush1.xpose.msra.mxu0 0.0
    %187 = vmatprep.subr.mxu0 0.0
    %188 = vmatpush1.xpose.msra.mxu0 0.0
    %189 = vmatprep.subr.mxu0 0.0
    %190 = vmatpush1.xpose.msra.mxu0 0.0
    %191 = vmatprep.subr.mxu0 0.0
    %192 = vmatpush1.xpose.msra.mxu0 0.0
    %193 = vmatprep.subr.mxu0 0.0
    %194 = vmatpush1.xpose.msra.mxu0 0.0
    %195 = vmatprep.subr.mxu0 0.0
    %196 = vmatpush1.xpose.msra.mxu0 0.0
    %197 = vmatprep.subr.mxu0 0.0
    %198 = vmatpush1.xpose.msra.mxu0 0.0
    %199 = vmatprep.subr.mxu0 0.0
    %200 = vmatpush1.xpose.msra.mxu0 0.0
    %201 = vmatprep.subr.mxu0 0.0
    %202 = vmatpush1.xpose.msra.mxu0 0.0
    %203 = vmatprep.subr.mxu0 0.0
    %204 = vmatpush1.xpose.msra.mxu0 0.0
    %205 = vmatprep.subr.mxu0 0.0
    %206 = vmatpush1.xpose.msra.mxu0 0.0
    %207 = vmatprep.subr.mxu0 0.0
    %208 = vmatpush1.xpose.msra.mxu0 0.0
    %209 = vmatprep.subr.mxu0 0.0
    %210 = vmatpush1.xpose.msra.mxu0 0.0
    %211 = vmatprep.subr.mxu0 0.0
    %212 = vmatpush1.xpose.msra.mxu0 0.0
    %213 = vmatprep.subr.mxu0 0.0
    %214 = vmatpush1.xpose.msra.mxu0 0.0
    %215 = vmatprep.mubr.f32.mxu0 0.0
    %216 = vmatmul.mubr.f32.gmra.mrb[0].mxu0 %v140
    %v217 = vpop.f32.mrb[0].mxu0
    %v218 = vadd.f32 0.0, %v217
    %v219 = vpop.f32.mrb[0].mxu0
    %220 = vmatprep.mubr.f32.mxu0 0.0
    %221 = vmatmul.mubr.f32.gmra.mrb[0].mxu0 %v143
    %v222 = vpop.f32.mrb[0].mxu0
    %v223 = vadd.f32 0.0, %v222
    %v224 = vpop.f32.mrb[0].mxu0
    %225 = vdwg.mxu0
    %v227 = vsel %vm86, %v133, 0
    %v230 = vsel %vm86, %v134, 0
    %v233 = vsel %vm86, %v137, 0
    %v236 = vsel %vm86, %v138, 0
    %238 = vmatprep.subr.mxu0 0.0
    %239 = vmatpush1.xpose.msra.mxu0 %v233
    %240 = vmatprep.subr.mxu0 0.0
    %241 = vmatpush1.xpose.msra.mxu0 %v236
    %242 = vmatprep.subr.mxu0 0.0
    %243 = vmatpush1.xpose.msra.mxu0 0.0
    %244 = vmatprep.subr.mxu0 0.0
    %245 = vmatpush1.xpose.msra.mxu0 0.0
    %246 = vmatprep.subr.mxu0 0.0
    %247 = vmatpush1.xpose.msra.mxu0 0.0
    %248 = vmatprep.subr.mxu0 0.0
    %249 = vmatpush1.xpose.msra.mxu0 0.0
    %250 = vmatprep.subr.mxu0 0.0
    %251 = vmatpush1.xpose.msra.mxu0 0.0
    %252 = vmatprep.subr.mxu0 0.0
    %253 = vmatpush1.xpose.msra.mxu0 0.0
    %254 = vmatprep.subr.mxu0 0.0
    %255 = vmatpush1.xpose.msra.mxu0 0.0
    %256 = vmatprep.subr.mxu0 0.0
    %257 = vmatpush1.xpose.msra.mxu0 0.0
    %258 = vmatprep.subr.mxu0 0.0
    %259 = vmatpush1.xpose.msra.mxu0 0.0
    %260 = vmatprep.subr.mxu0 0.0
    %261 = vmatpush1.xpose.msra.mxu0 0.0
    %262 = vmatprep.subr.mxu0 0.0
    %263 = vmatpush1.xpose.msra.mxu0 0.0
    %264 = vmatprep.subr.mxu0 0.0
    %265 = vmatpush1.xpose.msra.mxu0 0.0
    %266 = vmatprep.subr.mxu0 0.0
    %267 = vmatpush1.xpose.msra.mxu0 0.0
    %268 = vmatprep.subr.mxu0 0.0
    %269 = vmatpush1.xpose.msra.mxu0 0.0
    %270 = vmatprep.subr.mxu0 0.0
    %271 = vmatpush1.xpose.msra.mxu0 0.0
    %272 = vmatprep.subr.mxu0 0.0
    %273 = vmatpush1.xpose.msra.mxu0 0.0
    %274 = vmatprep.subr.mxu0 0.0
    %275 = vmatpush1.xpose.msra.mxu0 0.0
    %276 = vmatprep.subr.mxu0 0.0
    %277 = vmatpush1.xpose.msra.mxu0 0.0
    %278 = vmatprep.subr.mxu0 0.0
    %279 = vmatpush1.xpose.msra.mxu0 0.0
    %280 = vmatprep.subr.mxu0 0.0
    %281 = vmatpush1.xpose.msra.mxu0 0.0
    %282 = vmatprep.subr.mxu0 0.0
    %283 = vmatpush1.xpose.msra.mxu0 0.0
    %284 = vmatprep.subr.mxu0 0.0
    %285 = vmatpush1.xpose.msra.mxu0 0.0
    %286 = vmatprep.subr.mxu0 0.0
    %287 = vmatpush1.xpose.msra.mxu0 0.0
    %288 = vmatprep.subr.mxu0 0.0
    %289 = vmatpush1.xpose.msra.mxu0 0.0
    %290 = vmatprep.subr.mxu0 0.0
    %291 = vmatpush1.xpose.msra.mxu0 0.0
    %292 = vmatprep.subr.mxu0 0.0
    %293 = vmatpush1.xpose.msra.mxu0 0.0
    %294 = vmatprep.subr.mxu0 0.0
    %295 = vmatpush1.xpose.msra.mxu0 0.0
    %296 = vmatprep.subr.mxu0 0.0
    %297 = vmatpush1.xpose.msra.mxu0 0.0
    %298 = vmatprep.subr.mxu0 0.0
    %299 = vmatpush1.xpose.msra.mxu0 0.0
    %300 = vmatprep.subr.mxu0 0.0
    %301 = vmatpush1.xpose.msra.mxu0 0.0
    %302 = vmatprep.mubr.f32.mxu0 0.0
    %303 = vmatmul.mubr.f32.gmra.mrb[0].mxu0 %v227
    %v304 = vpop.f32.mrb[0].mxu0
    %v305 = vadd.f32 0.0, %v304
    %v306 = vpop.f32.mrb[0].mxu0
    %307 = vmatprep.mubr.f32.mxu0 0.0
    %308 = vmatmul.mubr.f32.gmra.mrb[0].mxu0 %v230
    %v309 = vpop.f32.mrb[0].mxu0
    %v310 = vadd.f32 0.0, %v309
    %v311 = vpop.f32.mrb[0].mxu0
    %312 = vdwg.mxu0
    %v313 = vmul.f32 %v218, 10.0
    %v314 = vmul.f32 %v223, 10.0
    %v315 = vmul.f32 %v305, 10.0
    %v316 = vmul.f32 %v310, 10.0
    %v317 = vmul.f32 %v313, 1.442695
    %v318 = vpow.pop %v317
    %v319 = vmul.f32 %v314, 1.442695
    %v320 = vpow.pop %v319
    %v321 = vmul.f32 %v315, 1.442695
    %v322 = vpow.pop %v321
    %v323 = vmul.f32 %v316, 1.442695
    %v324 = vpow.pop %v323
    %vm325 = vcmask 130048
    %v326 = vsel %vm325, %v318, 0.0
    %v327 = vsel %vm325, %v320, 0.0
    %v328 = vadd.f32 %v326, %v327
    %v329 = vrot.slane %v328, 4
    %v330 = vadd.f32 %v328, %v329
    %v331 = vrot.slane %v330, 2
    %v332 = vadd.f32 %v330, %v331
    %v333 = vrot.slane %v332, 1
    %v334 = vadd.f32 %v332, %v333
    %v335 = vsel %vm325, %v322, 0.0
    %v336 = vsel %vm325, %v324, 0.0
    %v337 = vadd.f32 %v335, %v336
    %v338 = vrot.slane %v337, 4
    %v339 = vadd.f32 %v337, %v338
    %v340 = vrot.slane %v339, 2
    %v341 = vadd.f32 %v339, %v340
    %v342 = vrot.slane %v341, 1
    %v343 = vadd.f32 %v341, %v342
    %344 = vadd.xlane.f32.xlu0 %v326
    %v345 = vpop.xlane.xlu0 %344
    %346 = vadd.xlane.f32.xlu0 %v327
    %v347 = vpop.xlane.xlu0 %346
    %348 = vadd.xlane.f32.xlu0 %v335
    %v349 = vpop.xlane.xlu0 %348
    %350 = vadd.xlane.f32.xlu0 %v336
    %v351 = vpop.xlane.xlu0 %350
    %v352 = vadd.f32 %v334, %v345
    %v353 = vadd.f32 %v334, %v347
    %v354 = vadd.f32 %v343, %v349
    %v355 = vadd.f32 %v343, %v351
    %v356 = vsub.f32 %v352, %v318
    %v357 = vsub.f32 %v353, %v320
    %v358 = vsub.f32 %v354, %v322
    %v359 = vsub.f32 %v355, %v324
    %v360 = vrcp.pop %v356
    %v361 = vmul.f32 %v318, %v360
    %v362 = vrcp.pop %v357
    %v363 = vmul.f32 %v320, %v362
    %v364 = vrcp.pop %v358
    %v365 = vmul.f32 %v322, %v364
    %v366 = vrcp.pop %v359
    %v367 = vmul.f32 %v324, %v366
    %v368 = vsub.f32 1.0, %v361
    %v369 = vsub.f32 1.0, %v363
    %v370 = vsub.f32 1.0, %v365
    %v371 = vsub.f32 1.0, %v367
    %v372 = vlaneseq
    %v373 = vshrl.u32 %v372, 7
    %v374 = vadd.s32 %v373, 8
    %v375 = vlaneseq
    %v376 = vand.u32 %v375, 127
    %vm377 = vcmp.lt.s32.totalorder %v373, 8
    %vm378 = vcmp.lt.s32.totalorder %v374, 8
    %v379 = vsel %vm377, 1.0, 0.0
    %v380 = vsel %vm378, 1.0, 0.0
    %vm381 = vcmp.lt.s32.totalorder %v376, 8
    %v382 = vsel %vm381, 1.0, 0.0
    %v383 = vsel %vm377, 0.0, -100000.0
    %v384 = vsel %vm378, 0.0, -100000.0
    %v385 = vsel %vm381, 0.0, -100000.0
    %v386 = vmul.f32 %v368, 0.11111111
    %v387 = vmul.f32 %v369, 0.11111111
    %v388 = vmul.f32 %v370, 0.11111111
    %v389 = vmul.f32 %v371, 0.11111111
    %v390 = vsub.f32 %v383, %v386
    %v391 = vsub.f32 %v384, %v387
    %v392 = vsub.f32 %v383, %v388
    %v393 = vsub.f32 %v384, %v389
    %v394 = vsel %vm325, %v390, -inf
    %v395 = vsel %vm325, %v391, -inf
    %v396 = vmax.f32 %v394, %v395
    %v397 = vrot.slane %v396, 4
    %v398 = vmax.f32 %v396, %v397
    %v399 = vrot.slane %v398, 2
    %v400 = vmax.f32 %v398, %v399
    %v401 = vrot.slane %v400, 1
    %v402 = vmax.f32 %v400, %v401
    %v403 = vsel %vm325, %v392, -inf
    %v404 = vsel %vm325, %v393, -inf
    %v405 = vmax.f32 %v403, %v404
    %v406 = vrot.slane %v405, 4
    %v407 = vmax.f32 %v405, %v406
    %v408 = vrot.slane %v407, 2
    %v409 = vmax.f32 %v407, %v408
    %v410 = vrot.slane %v409, 1
    %v411 = vmax.f32 %v409, %v410
    %v412 = vsub.f32 %v390, %v402
    %v413 = vsub.f32 %v391, %v402
    %v414 = vsub.f32 %v392, %v411
    %v415 = vsub.f32 %v393, %v411
    %v416 = vmul.f32 %v412, 1.442695
    %v417 = vpow.pop %v416
    %v418 = vmul.f32 %v413, 1.442695
    %v419 = vpow.pop %v418
    %v420 = vmul.f32 %v414, 1.442695
    %v421 = vpow.pop %v420
    %v422 = vmul.f32 %v415, 1.442695
    %v423 = vpow.pop %v422
    %v424 = vsel %vm325, %v417, 0.0
    %v425 = vsel %vm325, %v419, 0.0
    %v426 = vadd.f32 %v424, %v425
    %v427 = vrot.slane %v426, 4
    %v428 = vadd.f32 %v426, %v427
    %v429 = vrot.slane %v428, 2
    %v430 = vadd.f32 %v428, %v429
    %v431 = vrot.slane %v430, 1
    %v432 = vadd.f32 %v430, %v431
    %v433 = vsel %vm325, %v421, 0.0
    %v434 = vsel %vm325, %v423, 0.0
    %v435 = vadd.f32 %v433, %v434
    %v436 = vrot.slane %v435, 4
    %v437 = vadd.f32 %v435, %v436
    %v438 = vrot.slane %v437, 2
    %v439 = vadd.f32 %v437, %v438
    %v440 = vrot.slane %v439, 1
    %v441 = vadd.f32 %v439, %v440
    %v442 = vlog2.pop %v432
    %v443 = vmul.f32 %v442, 0.6931472
    %v444 = vlog2.pop %v441
    %v445 = vmul.f32 %v444, 0.6931472
    %v446 = vadd.f32 %v443, %v402
    %v447 = vadd.f32 %v445, %v411
    %v448 = vmul.f32 %v446, -9.0
    %v449 = vmul.f32 %v447, -9.0
    %v450 = vsub.f32 %v385, %v386
    %v451 = vsub.f32 %v385, %v387
    %v452 = vsub.f32 %v385, %v388
    %v453 = vsub.f32 %v385, %v389
    %v454 = vsel %vm325, %v450, -inf
    %455 = vmax.xlane.f32.xlu0 %v454
    %v456 = vpop.xlane.xlu0 %455
    %v457 = vsel %vm325, %v451, -inf
    %458 = vmax.xlane.f32.xlu0 %v457
    %v459 = vpop.xlane.xlu0 %458
    %v460 = vsel %vm325, %v452, -inf
    %461 = vmax.xlane.f32.xlu0 %v460
    %v462 = vpop.xlane.xlu0 %461
    %v463 = vsel %vm325, %v453, -inf
    %464 = vmax.xlane.f32.xlu0 %v463
    %v465 = vpop.xlane.xlu0 %464
    %v466 = vsub.f32 %v450, %v456
    %v467 = vsub.f32 %v451, %v459
    %v468 = vsub.f32 %v452, %v462
    %v469 = vsub.f32 %v453, %v465
    %v470 = vmul.f32 %v466, 1.442695
    %v471 = vpow.pop %v470
    %v472 = vmul.f32 %v467, 1.442695
    %v473 = vpow.pop %v472
    %v474 = vmul.f32 %v468, 1.442695
    %v475 = vpow.pop %v474
    %v476 = vmul.f32 %v469, 1.442695
    %v477 = vpow.pop %v476
    %v478 = vsel %vm325, %v471, 0.0
    %479 = vadd.xlane.f32.xlu0 %v478
    %v480 = vpop.xlane.xlu0 %479
    %v481 = vsel %vm325, %v473, 0.0
    %482 = vadd.xlane.f32.xlu0 %v481
    %v483 = vpop.xlane.xlu0 %482
    %v484 = vsel %vm325, %v475, 0.0
    %485 = vadd.xlane.f32.xlu0 %v484
    %v486 = vpop.xlane.xlu0 %485
    %v487 = vsel %vm325, %v477, 0.0
    %488 = vadd.xlane.f32.xlu0 %v487
    %v489 = vpop.xlane.xlu0 %488
    %v490 = vlog2.pop %v480
    %v491 = vmul.f32 %v490, 0.6931472
    %v492 = vlog2.pop %v483
    %v493 = vmul.f32 %v492, 0.6931472
    %v494 = vlog2.pop %v486
    %v495 = vmul.f32 %v494, 0.6931472
    %v496 = vlog2.pop %v489
    %v497 = vmul.f32 %v496, 0.6931472
    %v498 = vadd.f32 %v491, %v456
    %v499 = vadd.f32 %v493, %v459
    %v500 = vadd.f32 %v495, %v462
    %v501 = vadd.f32 %v497, %v465
    %v502 = vmul.f32 %v498, -9.0
    %v503 = vmul.f32 %v499, -9.0
    %v504 = vmul.f32 %v500, -9.0
    %v505 = vmul.f32 %v501, -9.0
    %v506 = vmul.f32 %v448, 0.11111111
    %v507 = vmul.f32 %v449, 0.11111111
    %v508 = vadd.f32 %v385, %v506
    %v509 = vadd.f32 %v385, %v507
    %v510 = vsub.f32 %v508, %v386
    %v511 = vsub.f32 %v508, %v387
    %v512 = vsub.f32 %v509, %v388
    %v513 = vsub.f32 %v509, %v389
    %v514 = vsel %vm325, %v510, -inf
    %515 = vmax.xlane.f32.xlu0 %v514
    %v516 = vpop.xlane.xlu0 %515
    %v517 = vsel %vm325, %v511, -inf
    %518 = vmax.xlane.f32.xlu0 %v517
    %v519 = vpop.xlane.xlu0 %518
    %v520 = vsel %vm325, %v512, -inf
    %521 = vmax.xlane.f32.xlu0 %v520
    %v522 = vpop.xlane.xlu0 %521
    %v523 = vsel %vm325, %v513, -inf
    %524 = vmax.xlane.f32.xlu0 %v523
    %v525 = vpop.xlane.xlu0 %524
    %v526 = vsub.f32 %v510, %v516
    %v527 = vsub.f32 %v511, %v519
    %v528 = vsub.f32 %v512, %v522
    %v529 = vsub.f32 %v513, %v525
    %v530 = vmul.f32 %v526, 1.442695
    %v531 = vpow.pop %v530
    %v532 = vmul.f32 %v527, 1.442695
    %v533 = vpow.pop %v532
    %v534 = vmul.f32 %v528, 1.442695
    %v535 = vpow.pop %v534
    %v536 = vmul.f32 %v529, 1.442695
    %v537 = vpow.pop %v536
    %v538 = vsel %vm325, %v531, 0.0
    %539 = vadd.xlane.f32.xlu0 %v538
    %v540 = vpop.xlane.xlu0 %539
    %v541 = vsel %vm325, %v533, 0.0
    %542 = vadd.xlane.f32.xlu0 %v541
    %v543 = vpop.xlane.xlu0 %542
    %v544 = vsel %vm325, %v535, 0.0
    %545 = vadd.xlane.f32.xlu0 %v544
    %v546 = vpop.xlane.xlu0 %545
    %v547 = vsel %vm325, %v537, 0.0
    %548 = vadd.xlane.f32.xlu0 %v547
    %v549 = vpop.xlane.xlu0 %548
    %v550 = vlog2.pop %v540
    %v551 = vmul.f32 %v550, 0.6931472
    %v552 = vlog2.pop %v543
    %v553 = vmul.f32 %v552, 0.6931472
    %v554 = vlog2.pop %v546
    %v555 = vmul.f32 %v554, 0.6931472
    %v556 = vlog2.pop %v549
    %v557 = vmul.f32 %v556, 0.6931472
    %v558 = vadd.f32 %v551, %v516
    %v559 = vadd.f32 %v553, %v519
    %v560 = vadd.f32 %v555, %v522
    %v561 = vadd.f32 %v557, %v525
    %v562 = vmul.f32 %v558, -9.0
    %v563 = vmul.f32 %v559, -9.0
    %v564 = vmul.f32 %v560, -9.0
    %v565 = vmul.f32 %v561, -9.0
    %v566 = vmul.f32 %v502, 0.11111111
    %v567 = vmul.f32 %v503, 0.11111111
    %v568 = vmul.f32 %v504, 0.11111111
    %v569 = vmul.f32 %v505, 0.11111111
    %v570 = vadd.f32 %v383, %v566
    %v571 = vadd.f32 %v384, %v567
    %v572 = vadd.f32 %v383, %v568
    %v573 = vadd.f32 %v384, %v569
    %v574 = vsub.f32 %v570, %v386
    %v575 = vsub.f32 %v571, %v387
    %v576 = vsub.f32 %v572, %v388
    %v577 = vsub.f32 %v573, %v389
    %v578 = vsel %vm325, %v574, -inf
    %v579 = vsel %vm325, %v575, -inf
    %v580 = vmax.f32 %v578, %v579
    %v581 = vrot.slane %v580, 4
    %v582 = vmax.f32 %v580, %v581
    %v583 = vrot.slane %v582, 2
    %v584 = vmax.f32 %v582, %v583
    %v585 = vrot.slane %v584, 1
    %v586 = vmax.f32 %v584, %v585
    %v587 = vsel %vm325, %v576, -inf
    %v588 = vsel %vm325, %v577, -inf
    %v589 = vmax.f32 %v587, %v588
    %v590 = vrot.slane %v589, 4
    %v591 = vmax.f32 %v589, %v590
    %v592 = vrot.slane %v591, 2
    %v593 = vmax.f32 %v591, %v592
    %v594 = vrot.slane %v593, 1
    %v595 = vmax.f32 %v593, %v594
    %v596 = vsub.f32 %v574, %v586
    %v597 = vsub.f32 %v575, %v586
    %v598 = vsub.f32 %v576, %v595
    %v599 = vsub.f32 %v577, %v595
    %v600 = vmul.f32 %v596, 1.442695
    %v601 = vpow.pop %v600
    %v602 = vmul.f32 %v597, 1.442695
    %v603 = vpow.pop %v602
    %v604 = vmul.f32 %v598, 1.442695
    %v605 = vpow.pop %v604
    %v606 = vmul.f32 %v599, 1.442695
    %v607 = vpow.pop %v606
    %v608 = vsel %vm325, %v601, 0.0
    %v609 = vsel %vm325, %v603, 0.0
    %v610 = vadd.f32 %v608, %v609
    %v611 = vrot.slane %v610, 4
    %v612 = vadd.f32 %v610, %v611
    %v613 = vrot.slane %v612, 2
    %v614 = vadd.f32 %v612, %v613
    %v615 = vrot.slane %v614, 1
    %v616 = vadd.f32 %v614, %v615
    %v617 = vsel %vm325, %v605, 0.0
    %v618 = vsel %vm325, %v607, 0.0
    %v619 = vadd.f32 %v617, %v618
    %v620 = vrot.slane %v619, 4
    %v621 = vadd.f32 %v619, %v620
    %v622 = vrot.slane %v621, 2
    %v623 = vadd.f32 %v621, %v622
    %v624 = vrot.slane %v623, 1
    %v625 = vadd.f32 %v623, %v624
    %v626 = vlog2.pop %v616
    %v627 = vmul.f32 %v626, 0.6931472
    %v628 = vlog2.pop %v625
    %v629 = vmul.f32 %v628, 0.6931472
    %v630 = vadd.f32 %v627, %v586
    %v631 = vadd.f32 %v629, %v595
    %v632 = vmul.f32 %v630, -9.0
    %v633 = vmul.f32 %v631, -9.0
    %v634 = vadd.f32 %v502, %v562
    %v635 = vadd.f32 %v503, %v563
    %v636 = vadd.f32 %v504, %v564
    %v637 = vadd.f32 %v505, %v565
    %v638 = vmul.f32 %v634, 0.5
    %v639 = vmul.f32 %v635, 0.5
    %v640 = vmul.f32 %v636, 0.5
    %v641 = vmul.f32 %v637, 0.5
    %v642 = vadd.f32 %v448, %v632
    %v643 = vadd.f32 %v449, %v633
    %v644 = vmul.f32 %v642, 0.5
    %v645 = vmul.f32 %v643, 0.5
    %v646 = vmul.f32 %v644, 0.11111111
    %v647 = vmul.f32 %v645, 0.11111111
    %v648 = vadd.f32 %v385, %v646
    %v649 = vadd.f32 %v385, %v647
    %v650 = vsub.f32 %v648, %v386
    %v651 = vsub.f32 %v648, %v387
    %v652 = vsub.f32 %v649, %v388
    %v653 = vsub.f32 %v649, %v389
    %v654 = vsel %vm325, %v650, -inf
    %655 = vmax.xlane.f32.xlu0 %v654
    %v656 = vpop.xlane.xlu0 %655
    %v657 = vsel %vm325, %v651, -inf
    %658 = vmax.xlane.f32.xlu0 %v657
    %v659 = vpop.xlane.xlu0 %658
    %v660 = vsel %vm325, %v652, -inf
    %661 = vmax.xlane.f32.xlu0 %v660
    %v662 = vpop.xlane.xlu0 %661
    %v663 = vsel %vm325, %v653, -inf
    %664 = vmax.xlane.f32.xlu0 %v663
    %v665 = vpop.xlane.xlu0 %664
    %v666 = vsub.f32 %v650, %v656
    %v667 = vsub.f32 %v651, %v659
    %v668 = vsub.f32 %v652, %v662
    %v669 = vsub.f32 %v653, %v665
    %v670 = vmul.f32 %v666, 1.442695
    %v671 = vpow.pop %v670
    %v672 = vmul.f32 %v667, 1.442695
    %v673 = vpow.pop %v672
    %v674 = vmul.f32 %v668, 1.442695
    %v675 = vpow.pop %v674
    %v676 = vmul.f32 %v669, 1.442695
    %v677 = vpow.pop %v676
    %v678 = vsel %vm325, %v671, 0.0
    %679 = vadd.xlane.f32.xlu0 %v678
    %v680 = vpop.xlane.xlu0 %679
    %v681 = vsel %vm325, %v673, 0.0
    %682 = vadd.xlane.f32.xlu0 %v681
    %v683 = vpop.xlane.xlu0 %682
    %v684 = vsel %vm325, %v675, 0.0
    %685 = vadd.xlane.f32.xlu0 %v684
    %v686 = vpop.xlane.xlu0 %685
    %v687 = vsel %vm325, %v677, 0.0
    %688 = vadd.xlane.f32.xlu0 %v687
    %v689 = vpop.xlane.xlu0 %688
    %v690 = vlog2.pop %v680
    %v691 = vmul.f32 %v690, 0.6931472
    %v692 = vlog2.pop %v683
    %v693 = vmul.f32 %v692, 0.6931472
    %v694 = vlog2.pop %v686
    %v695 = vmul.f32 %v694, 0.6931472
    %v696 = vlog2.pop %v689
    %v697 = vmul.f32 %v696, 0.6931472
    %v698 = vadd.f32 %v691, %v656
    %v699 = vadd.f32 %v693, %v659
    %v700 = vadd.f32 %v695, %v662
    %v701 = vadd.f32 %v697, %v665
    %v702 = vmul.f32 %v698, -9.0
    %v703 = vmul.f32 %v699, -9.0
    %v704 = vmul.f32 %v700, -9.0
    %v705 = vmul.f32 %v701, -9.0
    %v706 = vmul.f32 %v638, 0.11111111
    %v707 = vmul.f32 %v639, 0.11111111
    %v708 = vmul.f32 %v640, 0.11111111
    %v709 = vmul.f32 %v641, 0.11111111
    %v710 = vadd.f32 %v383, %v706
    %v711 = vadd.f32 %v384, %v707
    %v712 = vadd.f32 %v383, %v708
    %v713 = vadd.f32 %v384, %v709
    %v714 = vsub.f32 %v710, %v386
    %v715 = vsub.f32 %v711, %v387
    %v716 = vsub.f32 %v712, %v388
    %v717 = vsub.f32 %v713, %v389
    %v718 = vsel %vm325, %v714, -inf
    %v719 = vsel %vm325, %v715, -inf
    %v720 = vmax.f32 %v718, %v719
    %v721 = vrot.slane %v720, 4
    %v722 = vmax.f32 %v720, %v721
    %v723 = vrot.slane %v722, 2
    %v724 = vmax.f32 %v722, %v723
    %v725 = vrot.slane %v724, 1
    %v726 = vmax.f32 %v724, %v725
    %v727 = vsel %vm325, %v716, -inf
    %v728 = vsel %vm325, %v717, -inf
    %v729 = vmax.f32 %v727, %v728
    %v730 = vrot.slane %v729, 4
    %v731 = vmax.f32 %v729, %v730
    %v732 = vrot.slane %v731, 2
    %v733 = vmax.f32 %v731, %v732
    %v734 = vrot.slane %v733, 1
    %v735 = vmax.f32 %v733, %v734
    %v736 = vsub.f32 %v714, %v726
    %v737 = vsub.f32 %v715, %v726
    %v738 = vsub.f32 %v716, %v735
    %v739 = vsub.f32 %v717, %v735
    %v740 = vmul.f32 %v736, 1.442695
    %v741 = vpow.pop %v740
    %v742 = vmul.f32 %v737, 1.442695
    %v743 = vpow.pop %v742
    %v744 = vmul.f32 %v738, 1.442695
    %v745 = vpow.pop %v744
    %v746 = vmul.f32 %v739, 1.442695
    %v747 = vpow.pop %v746
    %v748 = vsel %vm325, %v741, 0.0
    %v749 = vsel %vm325, %v743, 0.0
    %v750 = vadd.f32 %v748, %v749
    %v751 = vrot.slane %v750, 4
    %v752 = vadd.f32 %v750, %v751
    %v753 = vrot.slane %v752, 2
    %v754 = vadd.f32 %v752, %v753
    %v755 = vrot.slane %v754, 1
    %v756 = vadd.f32 %v754, %v755
    %v757 = vsel %vm325, %v745, 0.0
    %v758 = vsel %vm325, %v747, 0.0
    %v759 = vadd.f32 %v757, %v758
    %v760 = vrot.slane %v759, 4
    %v761 = vadd.f32 %v759, %v760
    %v762 = vrot.slane %v761, 2
    %v763 = vadd.f32 %v761, %v762
    %v764 = vrot.slane %v763, 1
    %v765 = vadd.f32 %v763, %v764
    %v766 = vlog2.pop %v756
    %v767 = vmul.f32 %v766, 0.6931472
    %v768 = vlog2.pop %v765
    %v769 = vmul.f32 %v768, 0.6931472
    %v770 = vadd.f32 %v767, %v726
    %v771 = vadd.f32 %v769, %v735
    %v772 = vmul.f32 %v770, -9.0
    %v773 = vmul.f32 %v771, -9.0
    %v774 = vadd.f32 %v638, %v702
    %v775 = vadd.f32 %v639, %v703
    %v776 = vadd.f32 %v640, %v704
    %v777 = vadd.f32 %v641, %v705
    %v778 = vmul.f32 %v774, 0.5
    %v779 = vmul.f32 %v775, 0.5
    %v780 = vmul.f32 %v776, 0.5
    %v781 = vmul.f32 %v777, 0.5
    %v782 = vadd.f32 %v644, %v772
    %v783 = vadd.f32 %v645, %v773
    %v784 = vmul.f32 %v782, 0.5
    %v785 = vmul.f32 %v783, 0.5
    %v786 = vmul.f32 %v368, 0.44444445
    %v787 = vmul.f32 %v369, 0.44444445
    %v788 = vmul.f32 %v370, 0.44444445
    %v789 = vmul.f32 %v371, 0.44444445
    %v790 = vmul.f32 %v784, 0.44444445
    %v791 = vmul.f32 %v785, 0.44444445
    %v792 = vadd.f32 %v385, %v790
    %v793 = vadd.f32 %v385, %v791
    %v794 = vsub.f32 %v792, %v786
    %v795 = vsub.f32 %v792, %v787
    %v796 = vsub.f32 %v793, %v788
    %v797 = vsub.f32 %v793, %v789
    %v798 = vsel %vm325, %v794, -inf
    %799 = vmax.xlane.f32.xlu0 %v798
    %v800 = vpop.xlane.xlu0 %799
    %v801 = vsel %vm325, %v795, -inf
    %802 = vmax.xlane.f32.xlu0 %v801
    %v803 = vpop.xlane.xlu0 %802
    %v804 = vsel %vm325, %v796, -inf
    %805 = vmax.xlane.f32.xlu0 %v804
    %v806 = vpop.xlane.xlu0 %805
    %v807 = vsel %vm325, %v797, -inf
    %808 = vmax.xlane.f32.xlu0 %v807
    %v809 = vpop.xlane.xlu0 %808
    %v810 = vsub.f32 %v794, %v800
    %v811 = vsub.f32 %v795, %v803
    %v812 = vsub.f32 %v796, %v806
    %v813 = vsub.f32 %v797, %v809
    %v814 = vmul.f32 %v810, 1.442695
    %v815 = vpow.pop %v814
    %v816 = vmul.f32 %v811, 1.442695
    %v817 = vpow.pop %v816
    %v818 = vmul.f32 %v812, 1.442695
    %v819 = vpow.pop %v818
    %v820 = vmul.f32 %v813, 1.442695
    %v821 = vpow.pop %v820
    %v822 = vsel %vm325, %v815, 0.0
    %823 = vadd.xlane.f32.xlu0 %v822
    %v824 = vpop.xlane.xlu0 %823
    %v825 = vsel %vm325, %v817, 0.0
    %826 = vadd.xlane.f32.xlu0 %v825
    %v827 = vpop.xlane.xlu0 %826
    %v828 = vsel %vm325, %v819, 0.0
    %829 = vadd.xlane.f32.xlu0 %v828
    %v830 = vpop.xlane.xlu0 %829
    %v831 = vsel %vm325, %v821, 0.0
    %832 = vadd.xlane.f32.xlu0 %v831
    %v833 = vpop.xlane.xlu0 %832
    %v834 = vlog2.pop %v824
    %v835 = vmul.f32 %v834, 0.6931472
    %v836 = vlog2.pop %v827
    %v837 = vmul.f32 %v836, 0.6931472
    %v838 = vlog2.pop %v830
    %v839 = vmul.f32 %v838, 0.6931472
    %v840 = vlog2.pop %v833
    %v841 = vmul.f32 %v840, 0.6931472
    %v842 = vadd.f32 %v835, %v800
    %v843 = vadd.f32 %v837, %v803
    %v844 = vadd.f32 %v839, %v806
    %v845 = vadd.f32 %v841, %v809
    %v846 = vmul.f32 %v842, -2.25
    %v847 = vmul.f32 %v843, -2.25
    %v848 = vmul.f32 %v844, -2.25
    %v849 = vmul.f32 %v845, -2.25
    %v850 = vmul.f32 %v778, 0.44444445
    %v851 = vmul.f32 %v779, 0.44444445
    %v852 = vmul.f32 %v780, 0.44444445
    %v853 = vmul.f32 %v781, 0.44444445
    %v854 = vadd.f32 %v383, %v850
    %v855 = vadd.f32 %v384, %v851
    %v856 = vadd.f32 %v383, %v852
    %v857 = vadd.f32 %v384, %v853
    %v858 = vsub.f32 %v854, %v786
    %v859 = vsub.f32 %v855, %v787
    %v860 = vsub.f32 %v856, %v788
    %v861 = vsub.f32 %v857, %v789
    %v862 = vsel %vm325, %v858, -inf
    %v863 = vsel %vm325, %v859, -inf
    %v864 = vmax.f32 %v862, %v863
    %v865 = vrot.slane %v864, 4
    %v866 = vmax.f32 %v864, %v865
    %v867 = vrot.slane %v866, 2
    %v868 = vmax.f32 %v866, %v867
    %v869 = vrot.slane %v868, 1
    %v870 = vmax.f32 %v868, %v869
    %v871 = vsel %vm325, %v860, -inf
    %v872 = vsel %vm325, %v861, -inf
    %v873 = vmax.f32 %v871, %v872
    %v874 = vrot.slane %v873, 4
    %v875 = vmax.f32 %v873, %v874
    %v876 = vrot.slane %v875, 2
    %v877 = vmax.f32 %v875, %v876
    %v878 = vrot.slane %v877, 1
    %v879 = vmax.f32 %v877, %v878
    %v880 = vsub.f32 %v858, %v870
    %v881 = vsub.f32 %v859, %v870
    %v882 = vsub.f32 %v860, %v879
    %v883 = vsub.f32 %v861, %v879
    %v884 = vmul.f32 %v880, 1.442695
    %v885 = vpow.pop %v884
    %v886 = vmul.f32 %v881, 1.442695
    %v887 = vpow.pop %v886
    %v888 = vmul.f32 %v882, 1.442695
    %v889 = vpow.pop %v888
    %v890 = vmul.f32 %v883, 1.442695
    %v891 = vpow.pop %v890
    %v892 = vsel %vm325, %v885, 0.0
    %v893 = vsel %vm325, %v887, 0.0
    %v894 = vadd.f32 %v892, %v893
    %v895 = vrot.slane %v894, 4
    %v896 = vadd.f32 %v894, %v895
    %v897 = vrot.slane %v896, 2
    %v898 = vadd.f32 %v896, %v897
    %v899 = vrot.slane %v898, 1
    %v900 = vadd.f32 %v898, %v899
    %v901 = vsel %vm325, %v889, 0.0
    %v902 = vsel %vm325, %v891, 0.0
    %v903 = vadd.f32 %v901, %v902
    %v904 = vrot.slane %v903, 4
    %v905 = vadd.f32 %v903, %v904
    %v906 = vrot.slane %v905, 2
    %v907 = vadd.f32 %v905, %v906
    %v908 = vrot.slane %v907, 1
    %v909 = vadd.f32 %v907, %v908
    %v910 = vlog2.pop %v900
    %v911 = vmul.f32 %v910, 0.6931472
    %v912 = vlog2.pop %v909
    %v913 = vmul.f32 %v912, 0.6931472
    %v914 = vadd.f32 %v911, %v870
    %v915 = vadd.f32 %v913, %v879
    %v916 = vmul.f32 %v914, -2.25
    %v917 = vmul.f32 %v915, -2.25
    %v918 = vadd.f32 %v778, %v846
    %v919 = vadd.f32 %v779, %v847
    %v920 = vadd.f32 %v780, %v848
    %v921 = vadd.f32 %v781, %v849
    %v922 = vmul.f32 %v918, 0.5
    %v923 = vmul.f32 %v919, 0.5
    %v924 = vmul.f32 %v920, 0.5
    %v925 = vmul.f32 %v921, 0.5
    %v926 = vadd.f32 %v784, %v916
    %v927 = vadd.f32 %v785, %v917
    %v928 = vmul.f32 %v926, 0.5
    %v929 = vmul.f32 %v927, 0.5
    %v930 = vmul.f32 %v368, 1.7777778
    %v931 = vmul.f32 %v369, 1.7777778
    %v932 = vmul.f32 %v370, 1.7777778
    %v933 = vmul.f32 %v371, 1.7777778
    %v934 = vmul.f32 %v928, 1.7777778
    %v935 = vmul.f32 %v929, 1.7777778
    %v936 = vadd.f32 %v385, %v934
    %v937 = vadd.f32 %v385, %v935
    %v938 = vsub.f32 %v936, %v930
    %v939 = vsub.f32 %v936, %v931
    %v940 = vsub.f32 %v937, %v932
    %v941 = vsub.f32 %v937, %v933
    %v942 = vsel %vm325, %v938, -inf
    %943 = vmax.xlane.f32.xlu0 %v942
    %v944 = vpop.xlane.xlu0 %943
    %v945 = vsel %vm325, %v939, -inf
    %946 = vmax.xlane.f32.xlu0 %v945
    %v947 = vpop.xlane.xlu0 %946
    %v948 = vsel %vm325, %v940, -inf
    %949 = vmax.xlane.f32.xlu0 %v948
    %v950 = vpop.xlane.xlu0 %949
    %v951 = vsel %vm325, %v941, -inf
    %952 = vmax.xlane.f32.xlu0 %v951
    %v953 = vpop.xlane.xlu0 %952
    %v954 = vsub.f32 %v938, %v944
    %v955 = vsub.f32 %v939, %v947
    %v956 = vsub.f32 %v940, %v950
    %v957 = vsub.f32 %v941, %v953
    %v958 = vmul.f32 %v954, 1.442695
    %v959 = vpow.pop %v958
    %v960 = vmul.f32 %v955, 1.442695
    %v961 = vpow.pop %v960
    %v962 = vmul.f32 %v956, 1.442695
    %v963 = vpow.pop %v962
    %v964 = vmul.f32 %v957, 1.442695
    %v965 = vpow.pop %v964
    %v966 = vsel %vm325, %v959, 0.0
    %967 = vadd.xlane.f32.xlu0 %v966
    %v968 = vpop.xlane.xlu0 %967
    %v969 = vsel %vm325, %v961, 0.0
    %970 = vadd.xlane.f32.xlu0 %v969
    %v971 = vpop.xlane.xlu0 %970
    %v972 = vsel %vm325, %v963, 0.0
    %973 = vadd.xlane.f32.xlu0 %v972
    %v974 = vpop.xlane.xlu0 %973
    %v975 = vsel %vm325, %v965, 0.0
    %976 = vadd.xlane.f32.xlu0 %v975
    %v977 = vpop.xlane.xlu0 %976
    %v978 = vlog2.pop %v968
    %v979 = vmul.f32 %v978, 0.6931472
    %v980 = vlog2.pop %v971
    %v981 = vmul.f32 %v980, 0.6931472
    %v982 = vlog2.pop %v974
    %v983 = vmul.f32 %v982, 0.6931472
    %v984 = vlog2.pop %v977
    %v985 = vmul.f32 %v984, 0.6931472
    %v986 = vadd.f32 %v979, %v944
    %v987 = vadd.f32 %v981, %v947
    %v988 = vadd.f32 %v983, %v950
    %v989 = vadd.f32 %v985, %v953
    %v990 = vmul.f32 %v986, -0.5625
    %v991 = vmul.f32 %v987, -0.5625
    %v992 = vmul.f32 %v988, -0.5625
    %v993 = vmul.f32 %v989, -0.5625
    %v994 = vmul.f32 %v922, 1.7777778
    %v995 = vmul.f32 %v923, 1.7777778
    %v996 = vmul.f32 %v924, 1.7777778
    %v997 = vmul.f32 %v925, 1.7777778
    %v998 = vadd.f32 %v383, %v994
    %v999 = vadd.f32 %v384, %v995
    %v1000 = vadd.f32 %v383, %v996
    %v1001 = vadd.f32 %v384, %v997
    %v1002 = vsub.f32 %v998, %v930
    %v1003 = vsub.f32 %v999, %v931
    %v1004 = vsub.f32 %v1000, %v932
    %v1005 = vsub.f32 %v1001, %v933
    %v1006 = vsel %vm325, %v1002, -inf
    %v1007 = vsel %vm325, %v1003, -inf
    %v1008 = vmax.f32 %v1006, %v1007
    %v1009 = vrot.slane %v1008, 4
    %v1010 = vmax.f32 %v1008, %v1009
    %v1011 = vrot.slane %v1010, 2
    %v1012 = vmax.f32 %v1010, %v1011
    %v1013 = vrot.slane %v1012, 1
    %v1014 = vmax.f32 %v1012, %v1013
    %v1015 = vsel %vm325, %v1004, -inf
    %v1016 = vsel %vm325, %v1005, -inf
    %v1017 = vmax.f32 %v1015, %v1016
    %v1018 = vrot.slane %v1017, 4
    %v1019 = vmax.f32 %v1017, %v1018
    %v1020 = vrot.slane %v1019, 2
    %v1021 = vmax.f32 %v1019, %v1020
    %v1022 = vrot.slane %v1021, 1
    %v1023 = vmax.f32 %v1021, %v1022
    %v1024 = vsub.f32 %v1002, %v1014
    %v1025 = vsub.f32 %v1003, %v1014
    %v1026 = vsub.f32 %v1004, %v1023
    %v1027 = vsub.f32 %v1005, %v1023
    %v1028 = vmul.f32 %v1024, 1.442695
    %v1029 = vpow.pop %v1028
    %v1030 = vmul.f32 %v1025, 1.442695
    %v1031 = vpow.pop %v1030
    %v1032 = vmul.f32 %v1026, 1.442695
    %v1033 = vpow.pop %v1032
    %v1034 = vmul.f32 %v1027, 1.442695
    %v1035 = vpow.pop %v1034
    %v1036 = vsel %vm325, %v1029, 0.0
    %v1037 = vsel %vm325, %v1031, 0.0
    %v1038 = vadd.f32 %v1036, %v1037
    %v1039 = vrot.slane %v1038, 4
    %v1040 = vadd.f32 %v1038, %v1039
    %v1041 = vrot.slane %v1040, 2
    %v1042 = vadd.f32 %v1040, %v1041
    %v1043 = vrot.slane %v1042, 1
    %v1044 = vadd.f32 %v1042, %v1043
    %v1045 = vsel %vm325, %v1033, 0.0
    %v1046 = vsel %vm325, %v1035, 0.0
    %v1047 = vadd.f32 %v1045, %v1046
    %v1048 = vrot.slane %v1047, 4
    %v1049 = vadd.f32 %v1047, %v1048
    %v1050 = vrot.slane %v1049, 2
    %v1051 = vadd.f32 %v1049, %v1050
    %v1052 = vrot.slane %v1051, 1
    %v1053 = vadd.f32 %v1051, %v1052
    %v1054 = vlog2.pop %v1044
    %v1055 = vmul.f32 %v1054, 0.6931472
    %v1056 = vlog2.pop %v1053
    %v1057 = vmul.f32 %v1056, 0.6931472
    %v1058 = vadd.f32 %v1055, %v1014
    %v1059 = vadd.f32 %v1057, %v1023
    %v1060 = vmul.f32 %v1058, -0.5625
    %v1061 = vmul.f32 %v1059, -0.5625
    %v1062 = vadd.f32 %v922, %v990
    %v1063 = vadd.f32 %v923, %v991
    %v1064 = vadd.f32 %v924, %v992
    %v1065 = vadd.f32 %v925, %v993
    %v1066 = vmul.f32 %v1062, 0.5
    %v1067 = vmul.f32 %v1063, 0.5
    %v1068 = vmul.f32 %v1064, 0.5
    %v1069 = vmul.f32 %v1065, 0.5
    %v1070 = vadd.f32 %v928, %v1060
    %v1071 = vadd.f32 %v929, %v1061
    %v1072 = vmul.f32 %v1070, 0.5
    %v1073 = vmul.f32 %v1071, 0.5
    %v1074 = vmul.f32 %v368, 7.111111
    %v1075 = vmul.f32 %v369, 7.111111
    %v1076 = vmul.f32 %v370, 7.111111
    %v1077 = vmul.f32 %v371, 7.111111
    %v1078 = vmul.f32 %v1072, 7.111111
    %v1079 = vmul.f32 %v1073, 7.111111
    %v1080 = vadd.f32 %v385, %v1078
    %v1081 = vadd.f32 %v385, %v1079
    %v1082 = vsub.f32 %v1080, %v1074
    %v1083 = vsub.f32 %v1080, %v1075
    %v1084 = vsub.f32 %v1081, %v1076
    %v1085 = vsub.f32 %v1081, %v1077
    %v1086 = vsel %vm325, %v1082, -inf
    %1087 = vmax.xlane.f32.xlu0 %v1086
    %v1088 = vpop.xlane.xlu0 %1087
    %v1089 = vsel %vm325, %v1083, -inf
    %1090 = vmax.xlane.f32.xlu0 %v1089
    %v1091 = vpop.xlane.xlu0 %1090
    %v1092 = vsel %vm325, %v1084, -inf
    %1093 = vmax.xlane.f32.xlu0 %v1092
    %v1094 = vpop.xlane.xlu0 %1093
    %v1095 = vsel %vm325, %v1085, -inf
    %1096 = vmax.xlane.f32.xlu0 %v1095
    %v1097 = vpop.xlane.xlu0 %1096
    %v1098 = vsub.f32 %v1082, %v1088
    %v1099 = vsub.f32 %v1083, %v1091
    %v1100 = vsub.f32 %v1084, %v1094
    %v1101 = vsub.f32 %v1085, %v1097
    %v1102 = vmul.f32 %v1098, 1.442695
    %v1103 = vpow.pop %v1102
    %v1104 = vmul.f32 %v1099, 1.442695
    %v1105 = vpow.pop %v1104
    %v1106 = vmul.f32 %v1100, 1.442695
    %v1107 = vpow.pop %v1106
    %v1108 = vmul.f32 %v1101, 1.442695
    %v1109 = vpow.pop %v1108
    %v1110 = vsel %vm325, %v1103, 0.0
    %1111 = vadd.xlane.f32.xlu0 %v1110
    %v1112 = vpop.xlane.xlu0 %1111
    %v1113 = vsel %vm325, %v1105, 0.0
    %1114 = vadd.xlane.f32.xlu0 %v1113
    %v1115 = vpop.xlane.xlu0 %1114
    %v1116 = vsel %vm325, %v1107, 0.0
    %1117 = vadd.xlane.f32.xlu0 %v1116
    %v1118 = vpop.xlane.xlu0 %1117
    %v1119 = vsel %vm325, %v1109, 0.0
    %1120 = vadd.xlane.f32.xlu0 %v1119
    %v1121 = vpop.xlane.xlu0 %1120
    %v1122 = vlog2.pop %v1112
    %v1123 = vmul.f32 %v1122, 0.6931472
    %v1124 = vlog2.pop %v1115
    %v1125 = vmul.f32 %v1124, 0.6931472
    %v1126 = vlog2.pop %v1118
    %v1127 = vmul.f32 %v1126, 0.6931472
    %v1128 = vlog2.pop %v1121
    %v1129 = vmul.f32 %v1128, 0.6931472
    %v1130 = vadd.f32 %v1123, %v1088
    %v1131 = vadd.f32 %v1125, %v1091
    %v1132 = vadd.f32 %v1127, %v1094
    %v1133 = vadd.f32 %v1129, %v1097
    %v1134 = vmul.f32 %v1130, -0.140625
    %v1135 = vmul.f32 %v1131, -0.140625
    %v1136 = vmul.f32 %v1132, -0.140625
    %v1137 = vmul.f32 %v1133, -0.140625
    %v1138 = vmul.f32 %v1066, 7.111111
    %v1139 = vmul.f32 %v1067, 7.111111
    %v1140 = vmul.f32 %v1068, 7.111111
    %v1141 = vmul.f32 %v1069, 7.111111
    %v1142 = vadd.f32 %v383, %v1138
    %v1143 = vadd.f32 %v384, %v1139
    %v1144 = vadd.f32 %v383, %v1140
    %v1145 = vadd.f32 %v384, %v1141
    %v1146 = vsub.f32 %v1142, %v1074
    %v1147 = vsub.f32 %v1143, %v1075
    %v1148 = vsub.f32 %v1144, %v1076
    %v1149 = vsub.f32 %v1145, %v1077
    %v1150 = vsel %vm325, %v1146, -inf
    %v1151 = vsel %vm325, %v1147, -inf
    %v1152 = vmax.f32 %v1150, %v1151
    %v1153 = vrot.slane %v1152, 4
    %v1154 = vmax.f32 %v1152, %v1153
    %v1155 = vrot.slane %v1154, 2
    %v1156 = vmax.f32 %v1154, %v1155
    %v1157 = vrot.slane %v1156, 1
    %v1158 = vmax.f32 %v1156, %v1157
    %v1159 = vsel %vm325, %v1148, -inf
    %v1160 = vsel %vm325, %v1149, -inf
    %v1161 = vmax.f32 %v1159, %v1160
    %v1162 = vrot.slane %v1161, 4
    %v1163 = vmax.f32 %v1161, %v1162
    %v1164 = vrot.slane %v1163, 2
    %v1165 = vmax.f32 %v1163, %v1164
    %v1166 = vrot.slane %v1165, 1
    %v1167 = vmax.f32 %v1165, %v1166
    %v1168 = vsub.f32 %v1146, %v1158
    %v1169 = vsub.f32 %v1147, %v1158
    %v1170 = vsub.f32 %v1148, %v1167
    %v1171 = vsub.f32 %v1149, %v1167
    %v1172 = vmul.f32 %v1168, 1.442695
    %v1173 = vpow.pop %v1172
    %v1174 = vmul.f32 %v1169, 1.442695
    %v1175 = vpow.pop %v1174
    %v1176 = vmul.f32 %v1170, 1.442695
    %v1177 = vpow.pop %v1176
    %v1178 = vmul.f32 %v1171, 1.442695
    %v1179 = vpow.pop %v1178
    %v1180 = vsel %vm325, %v1173, 0.0
    %v1181 = vsel %vm325, %v1175, 0.0
    %v1182 = vadd.f32 %v1180, %v1181
    %v1183 = vrot.slane %v1182, 4
    %v1184 = vadd.f32 %v1182, %v1183
    %v1185 = vrot.slane %v1184, 2
    %v1186 = vadd.f32 %v1184, %v1185
    %v1187 = vrot.slane %v1186, 1
    %v1188 = vadd.f32 %v1186, %v1187
    %v1189 = vsel %vm325, %v1177, 0.0
    %v1190 = vsel %vm325, %v1179, 0.0
    %v1191 = vadd.f32 %v1189, %v1190
    %v1192 = vrot.slane %v1191, 4
    %v1193 = vadd.f32 %v1191, %v1192
    %v1194 = vrot.slane %v1193, 2
    %v1195 = vadd.f32 %v1193, %v1194
    %v1196 = vrot.slane %v1195, 1
    %v1197 = vadd.f32 %v1195, %v1196
    %v1198 = vlog2.pop %v1188
    %v1199 = vmul.f32 %v1198, 0.6931472
    %v1200 = vlog2.pop %v1197
    %v1201 = vmul.f32 %v1200, 0.6931472
    %v1202 = vadd.f32 %v1199, %v1158
    %v1203 = vadd.f32 %v1201, %v1167
    %v1204 = vmul.f32 %v1202, -0.140625
    %v1205 = vmul.f32 %v1203, -0.140625
    %v1206 = vadd.f32 %v1066, %v1134
    %v1207 = vadd.f32 %v1067, %v1135
    %v1208 = vadd.f32 %v1068, %v1136
    %v1209 = vadd.f32 %v1069, %v1137
    %v1210 = vmul.f32 %v1206, 0.5
    %v1211 = vmul.f32 %v1207, 0.5
    %v1212 = vmul.f32 %v1208, 0.5
    %v1213 = vmul.f32 %v1209, 0.5
    %v1214 = vadd.f32 %v1072, %v1204
    %v1215 = vadd.f32 %v1073, %v1205
    %v1216 = vmul.f32 %v1214, 0.5
    %v1217 = vmul.f32 %v1215, 0.5
    %v1218 = vmul.f32 %v368, 28.444445
    %v1219 = vmul.f32 %v369, 28.444445
    %v1220 = vmul.f32 %v370, 28.444445
    %v1221 = vmul.f32 %v371, 28.444445
    %v1222 = vmul.f32 %v1216, 28.444445
    %v1223 = vmul.f32 %v1217, 28.444445
    %v1224 = vadd.f32 %v385, %v1222
    %v1225 = vadd.f32 %v385, %v1223
    %v1226 = vsub.f32 %v1224, %v1218
    %v1227 = vsub.f32 %v1224, %v1219
    %v1228 = vsub.f32 %v1225, %v1220
    %v1229 = vsub.f32 %v1225, %v1221
    %v1230 = vsel %vm325, %v1226, -inf
    %1231 = vmax.xlane.f32.xlu0 %v1230
    %v1232 = vpop.xlane.xlu0 %1231
    %v1233 = vsel %vm325, %v1227, -inf
    %1234 = vmax.xlane.f32.xlu0 %v1233
    %v1235 = vpop.xlane.xlu0 %1234
    %v1236 = vsel %vm325, %v1228, -inf
    %1237 = vmax.xlane.f32.xlu0 %v1236
    %v1238 = vpop.xlane.xlu0 %1237
    %v1239 = vsel %vm325, %v1229, -inf
    %1240 = vmax.xlane.f32.xlu0 %v1239
    %v1241 = vpop.xlane.xlu0 %1240
    %v1242 = vsub.f32 %v1226, %v1232
    %v1243 = vsub.f32 %v1227, %v1235
    %v1244 = vsub.f32 %v1228, %v1238
    %v1245 = vsub.f32 %v1229, %v1241
    %v1246 = vmul.f32 %v1242, 1.442695
    %v1247 = vpow.pop %v1246
    %v1248 = vmul.f32 %v1243, 1.442695
    %v1249 = vpow.pop %v1248
    %v1250 = vmul.f32 %v1244, 1.442695
    %v1251 = vpow.pop %v1250
    %v1252 = vmul.f32 %v1245, 1.442695
    %v1253 = vpow.pop %v1252
    %v1254 = vsel %vm325, %v1247, 0.0
    %1255 = vadd.xlane.f32.xlu0 %v1254
    %v1256 = vpop.xlane.xlu0 %1255
    %v1257 = vsel %vm325, %v1249, 0.0
    %1258 = vadd.xlane.f32.xlu0 %v1257
    %v1259 = vpop.xlane.xlu0 %1258
    %v1260 = vsel %vm325, %v1251, 0.0
    %1261 = vadd.xlane.f32.xlu0 %v1260
    %v1262 = vpop.xlane.xlu0 %1261
    %v1263 = vsel %vm325, %v1253, 0.0
    %1264 = vadd.xlane.f32.xlu0 %v1263
    %v1265 = vpop.xlane.xlu0 %1264
    %v1266 = vlog2.pop %v1256
    %v1267 = vmul.f32 %v1266, 0.6931472
    %v1268 = vlog2.pop %v1259
    %v1269 = vmul.f32 %v1268, 0.6931472
    %v1270 = vlog2.pop %v1262
    %v1271 = vmul.f32 %v1270, 0.6931472
    %v1272 = vlog2.pop %v1265
    %v1273 = vmul.f32 %v1272, 0.6931472
    %v1274 = vadd.f32 %v1267, %v1232
    %v1275 = vadd.f32 %v1269, %v1235
    %v1276 = vadd.f32 %v1271, %v1238
    %v1277 = vadd.f32 %v1273, %v1241
    %v1278 = vmul.f32 %v1274, -0.03515625
    %v1279 = vmul.f32 %v1275, -0.03515625
    %v1280 = vmul.f32 %v1276, -0.03515625
    %v1281 = vmul.f32 %v1277, -0.03515625
    %v1282 = vmul.f32 %v1210, 28.444445
    %v1283 = vmul.f32 %v1211, 28.444445
    %v1284 = vmul.f32 %v1212, 28.444445
    %v1285 = vmul.f32 %v1213, 28.444445
    %v1286 = vadd.f32 %v383, %v1282
    %v1287 = vadd.f32 %v384, %v1283
    %v1288 = vadd.f32 %v383, %v1284
    %v1289 = vadd.f32 %v384, %v1285
    %v1290 = vsub.f32 %v1286, %v1218
    %v1291 = vsub.f32 %v1287, %v1219
    %v1292 = vsub.f32 %v1288, %v1220
    %v1293 = vsub.f32 %v1289, %v1221
    %v1294 = vsel %vm325, %v1290, -inf
    %v1295 = vsel %vm325, %v1291, -inf
    %v1296 = vmax.f32 %v1294, %v1295
    %v1297 = vrot.slane %v1296, 4
    %v1298 = vmax.f32 %v1296, %v1297
    %v1299 = vrot.slane %v1298, 2
    %v1300 = vmax.f32 %v1298, %v1299
    %v1301 = vrot.slane %v1300, 1
    %v1302 = vmax.f32 %v1300, %v1301
    %v1303 = vsel %vm325, %v1292, -inf
    %v1304 = vsel %vm325, %v1293, -inf
    %v1305 = vmax.f32 %v1303, %v1304
    %v1306 = vrot.slane %v1305, 4
    %v1307 = vmax.f32 %v1305, %v1306
    %v1308 = vrot.slane %v1307, 2
    %v1309 = vmax.f32 %v1307, %v1308
    %v1310 = vrot.slane %v1309, 1
    %v1311 = vmax.f32 %v1309, %v1310
    %v1312 = vsub.f32 %v1290, %v1302
    %v1313 = vsub.f32 %v1291, %v1302
    %v1314 = vsub.f32 %v1292, %v1311
    %v1315 = vsub.f32 %v1293, %v1311
    %v1316 = vmul.f32 %v1312, 1.442695
    %v1317 = vpow.pop %v1316
    %v1318 = vmul.f32 %v1313, 1.442695
    %v1319 = vpow.pop %v1318
    %v1320 = vmul.f32 %v1314, 1.442695
    %v1321 = vpow.pop %v1320
    %v1322 = vmul.f32 %v1315, 1.442695
    %v1323 = vpow.pop %v1322
    %v1324 = vsel %vm325, %v1317, 0.0
    %v1325 = vsel %vm325, %v1319, 0.0
    %v1326 = vadd.f32 %v1324, %v1325
    %v1327 = vrot.slane %v1326, 4
    %v1328 = vadd.f32 %v1326, %v1327
    %v1329 = vrot.slane %v1328, 2
    %v1330 = vadd.f32 %v1328, %v1329
    %v1331 = vrot.slane %v1330, 1
    %v1332 = vadd.f32 %v1330, %v1331
    %v1333 = vsel %vm325, %v1321, 0.0
    %v1334 = vsel %vm325, %v1323, 0.0
    %v1335 = vadd.f32 %v1333, %v1334
    %v1336 = vrot.slane %v1335, 4
    %v1337 = vadd.f32 %v1335, %v1336
    %v1338 = vrot.slane %v1337, 2
    %v1339 = vadd.f32 %v1337, %v1338
    %v1340 = vrot.slane %v1339, 1
    %v1341 = vadd.f32 %v1339, %v1340
    %v1342 = vlog2.pop %v1332
    %v1343 = vmul.f32 %v1342, 0.6931472
    %v1344 = vlog2.pop %v1341
    %v1345 = vmul.f32 %v1344, 0.6931472
    %v1346 = vadd.f32 %v1343, %v1302
    %v1347 = vadd.f32 %v1345, %v1311
    %v1348 = vmul.f32 %v1346, -0.03515625
    %v1349 = vmul.f32 %v1347, -0.03515625
    %v1350 = vadd.f32 %v1210, %v1278
    %v1351 = vadd.f32 %v1211, %v1279
    %v1352 = vadd.f32 %v1212, %v1280
    %v1353 = vadd.f32 %v1213, %v1281
    %v1354 = vmul.f32 %v1350, 0.5
    %v1355 = vmul.f32 %v1351, 0.5
    %v1356 = vmul.f32 %v1352, 0.5
    %v1357 = vmul.f32 %v1353, 0.5
    %v1358 = vadd.f32 %v1216, %v1348
    %v1359 = vadd.f32 %v1217, %v1349
    %v1360 = vmul.f32 %v1358, 0.5
    %v1361 = vmul.f32 %v1359, 0.5
    %v1362 = vmul.f32 %v368, 113.77778
    %v1363 = vmul.f32 %v369, 113.77778
    %v1364 = vmul.f32 %v370, 113.77778
    %v1365 = vmul.f32 %v371, 113.77778
    %v1366 = vmul.f32 %v1360, 113.77778
    %v1367 = vmul.f32 %v1361, 113.77778
    %v1368 = vadd.f32 %v385, %v1366
    %v1369 = vadd.f32 %v385, %v1367
    %v1370 = vsub.f32 %v1368, %v1362
    %v1371 = vsub.f32 %v1368, %v1363
    %v1372 = vsub.f32 %v1369, %v1364
    %v1373 = vsub.f32 %v1369, %v1365
    %v1374 = vsel %vm325, %v1370, -inf
    %1375 = vmax.xlane.f32.xlu0 %v1374
    %v1376 = vpop.xlane.xlu0 %1375
    %v1377 = vsel %vm325, %v1371, -inf
    %1378 = vmax.xlane.f32.xlu0 %v1377
    %v1379 = vpop.xlane.xlu0 %1378
    %v1380 = vsel %vm325, %v1372, -inf
    %1381 = vmax.xlane.f32.xlu0 %v1380
    %v1382 = vpop.xlane.xlu0 %1381
    %v1383 = vsel %vm325, %v1373, -inf
    %1384 = vmax.xlane.f32.xlu0 %v1383
    %v1385 = vpop.xlane.xlu0 %1384
    %v1386 = vsub.f32 %v1370, %v1376
    %v1387 = vsub.f32 %v1371, %v1379
    %v1388 = vsub.f32 %v1372, %v1382
    %v1389 = vsub.f32 %v1373, %v1385
    %v1390 = vmul.f32 %v1386, 1.442695
    %v1391 = vpow.pop %v1390
    %v1392 = vmul.f32 %v1387, 1.442695
    %v1393 = vpow.pop %v1392
    %v1394 = vmul.f32 %v1388, 1.442695
    %v1395 = vpow.pop %v1394
    %v1396 = vmul.f32 %v1389, 1.442695
    %v1397 = vpow.pop %v1396
    %v1398 = vsel %vm325, %v1391, 0.0
    %1399 = vadd.xlane.f32.xlu0 %v1398
    %v1400 = vpop.xlane.xlu0 %1399
    %v1401 = vsel %vm325, %v1393, 0.0
    %1402 = vadd.xlane.f32.xlu0 %v1401
    %v1403 = vpop.xlane.xlu0 %1402
    %v1404 = vsel %vm325, %v1395, 0.0
    %1405 = vadd.xlane.f32.xlu0 %v1404
    %v1406 = vpop.xlane.xlu0 %1405
    %v1407 = vsel %vm325, %v1397, 0.0
    %1408 = vadd.xlane.f32.xlu0 %v1407
    %v1409 = vpop.xlane.xlu0 %1408
    %v1410 = vlog2.pop %v1400
    %v1411 = vmul.f32 %v1410, 0.6931472
    %v1412 = vlog2.pop %v1403
    %v1413 = vmul.f32 %v1412, 0.6931472
    %v1414 = vlog2.pop %v1406
    %v1415 = vmul.f32 %v1414, 0.6931472
    %v1416 = vlog2.pop %v1409
    %v1417 = vmul.f32 %v1416, 0.6931472
    %v1418 = vadd.f32 %v1411, %v1376
    %v1419 = vadd.f32 %v1413, %v1379
    %v1420 = vadd.f32 %v1415, %v1382
    %v1421 = vadd.f32 %v1417, %v1385
    %v1422 = vmul.f32 %v1418, -0.0087890625
    %v1423 = vmul.f32 %v1419, -0.0087890625
    %v1424 = vmul.f32 %v1420, -0.0087890625
    %v1425 = vmul.f32 %v1421, -0.0087890625
    %v1426 = vmul.f32 %v1354, 113.77778
    %v1427 = vmul.f32 %v1355, 113.77778
    %v1428 = vmul.f32 %v1356, 113.77778
    %v1429 = vmul.f32 %v1357, 113.77778
    %v1430 = vadd.f32 %v383, %v1426
    %v1431 = vadd.f32 %v384, %v1427
    %v1432 = vadd.f32 %v383, %v1428
    %v1433 = vadd.f32 %v384, %v1429
    %v1434 = vsub.f32 %v1430, %v1362
    %v1435 = vsub.f32 %v1431, %v1363
    %v1436 = vsub.f32 %v1432, %v1364
    %v1437 = vsub.f32 %v1433, %v1365
    %v1438 = vsel %vm325, %v1434, -inf
    %v1439 = vsel %vm325, %v1435, -inf
    %v1440 = vmax.f32 %v1438, %v1439
    %v1441 = vrot.slane %v1440, 4
    %v1442 = vmax.f32 %v1440, %v1441
    %v1443 = vrot.slane %v1442, 2
    %v1444 = vmax.f32 %v1442, %v1443
    %v1445 = vrot.slane %v1444, 1
    %v1446 = vmax.f32 %v1444, %v1445
    %v1447 = vsel %vm325, %v1436, -inf
    %v1448 = vsel %vm325, %v1437, -inf
    %v1449 = vmax.f32 %v1447, %v1448
    %v1450 = vrot.slane %v1449, 4
    %v1451 = vmax.f32 %v1449, %v1450
    %v1452 = vrot.slane %v1451, 2
    %v1453 = vmax.f32 %v1451, %v1452
    %v1454 = vrot.slane %v1453, 1
    %v1455 = vmax.f32 %v1453, %v1454
    %v1456 = vsub.f32 %v1434, %v1446
    %v1457 = vsub.f32 %v1435, %v1446
    %v1458 = vsub.f32 %v1436, %v1455
    %v1459 = vsub.f32 %v1437, %v1455
    %v1460 = vmul.f32 %v1456, 1.442695
    %v1461 = vpow.pop %v1460
    %v1462 = vmul.f32 %v1457, 1.442695
    %v1463 = vpow.pop %v1462
    %v1464 = vmul.f32 %v1458, 1.442695
    %v1465 = vpow.pop %v1464
    %v1466 = vmul.f32 %v1459, 1.442695
    %v1467 = vpow.pop %v1466
    %v1468 = vsel %vm325, %v1461, 0.0
    %v1469 = vsel %vm325, %v1463, 0.0
    %v1470 = vadd.f32 %v1468, %v1469
    %v1471 = vrot.slane %v1470, 4
    %v1472 = vadd.f32 %v1470, %v1471
    %v1473 = vrot.slane %v1472, 2
    %v1474 = vadd.f32 %v1472, %v1473
    %v1475 = vrot.slane %v1474, 1
    %v1476 = vadd.f32 %v1474, %v1475
    %v1477 = vsel %vm325, %v1465, 0.0
    %v1478 = vsel %vm325, %v1467, 0.0
    %v1479 = vadd.f32 %v1477, %v1478
    %v1480 = vrot.slane %v1479, 4
    %v1481 = vadd.f32 %v1479, %v1480
    %v1482 = vrot.slane %v1481, 2
    %v1483 = vadd.f32 %v1481, %v1482
    %v1484 = vrot.slane %v1483, 1
    %v1485 = vadd.f32 %v1483, %v1484
    %v1486 = vlog2.pop %v1476
    %v1487 = vmul.f32 %v1486, 0.6931472
    %v1488 = vlog2.pop %v1485
    %v1489 = vmul.f32 %v1488, 0.6931472
    %v1490 = vadd.f32 %v1487, %v1446
    %v1491 = vadd.f32 %v1489, %v1455
    %v1492 = vmul.f32 %v1490, -0.0087890625
    %v1493 = vmul.f32 %v1491, -0.0087890625
    %v1494 = vadd.f32 %v1354, %v1422
    %v1495 = vadd.f32 %v1355, %v1423
    %v1496 = vadd.f32 %v1356, %v1424
    %v1497 = vadd.f32 %v1357, %v1425
    %v1498 = vmul.f32 %v1494, 0.5
    %v1499 = vmul.f32 %v1495, 0.5
    %v1500 = vmul.f32 %v1496, 0.5
    %v1501 = vmul.f32 %v1497, 0.5
    %v1502 = vadd.f32 %v1360, %v1492
    %v1503 = vadd.f32 %v1361, %v1493
    %v1504 = vmul.f32 %v1502, 0.5
    %v1505 = vmul.f32 %v1503, 0.5
    %v1506 = vmul.f32 %v368, 400.0
    %v1507 = vmul.f32 %v369, 400.0
    %v1508 = vmul.f32 %v370, 400.0
    %v1509 = vmul.f32 %v371, 400.0
    %v1510 = vmul.f32 %v1504, 400.0
    %v1511 = vmul.f32 %v1505, 400.0
    %v1512 = vadd.f32 %v385, %v1510
    %v1513 = vadd.f32 %v385, %v1511
    %v1514 = vsub.f32 %v1512, %v1506
    %v1515 = vsub.f32 %v1512, %v1507
    %v1516 = vsub.f32 %v1513, %v1508
    %v1517 = vsub.f32 %v1513, %v1509
    %v1518 = vsel %vm325, %v1514, -inf
    %1519 = vmax.xlane.f32.xlu0 %v1518
    %v1520 = vpop.xlane.xlu0 %1519
    %v1521 = vsel %vm325, %v1515, -inf
    %1522 = vmax.xlane.f32.xlu0 %v1521
    %v1523 = vpop.xlane.xlu0 %1522
    %v1524 = vsel %vm325, %v1516, -inf
    %1525 = vmax.xlane.f32.xlu0 %v1524
    %v1526 = vpop.xlane.xlu0 %1525
    %v1527 = vsel %vm325, %v1517, -inf
    %1528 = vmax.xlane.f32.xlu0 %v1527
    %v1529 = vpop.xlane.xlu0 %1528
    %v1530 = vsub.f32 %v1514, %v1520
    %v1531 = vsub.f32 %v1515, %v1523
    %v1532 = vsub.f32 %v1516, %v1526
    %v1533 = vsub.f32 %v1517, %v1529
    %v1534 = vmul.f32 %v1530, 1.442695
    %v1535 = vpow.pop %v1534
    %v1536 = vmul.f32 %v1531, 1.442695
    %v1537 = vpow.pop %v1536
    %v1538 = vmul.f32 %v1532, 1.442695
    %v1539 = vpow.pop %v1538
    %v1540 = vmul.f32 %v1533, 1.442695
    %v1541 = vpow.pop %v1540
    %v1542 = vsel %vm325, %v1535, 0.0
    %1543 = vadd.xlane.f32.xlu0 %v1542
    %v1544 = vpop.xlane.xlu0 %1543
    %v1545 = vsel %vm325, %v1537, 0.0
    %1546 = vadd.xlane.f32.xlu0 %v1545
    %v1547 = vpop.xlane.xlu0 %1546
    %v1548 = vsel %vm325, %v1539, 0.0
    %1549 = vadd.xlane.f32.xlu0 %v1548
    %v1550 = vpop.xlane.xlu0 %1549
    %v1551 = vsel %vm325, %v1541, 0.0
    %1552 = vadd.xlane.f32.xlu0 %v1551
    %v1553 = vpop.xlane.xlu0 %1552
    %v1554 = vlog2.pop %v1544
    %v1555 = vmul.f32 %v1554, 0.6931472
    %v1556 = vlog2.pop %v1547
    %v1557 = vmul.f32 %v1556, 0.6931472
    %v1558 = vlog2.pop %v1550
    %v1559 = vmul.f32 %v1558, 0.6931472
    %v1560 = vlog2.pop %v1553
    %v1561 = vmul.f32 %v1560, 0.6931472
    %v1562 = vadd.f32 %v1555, %v1520
    %v1563 = vadd.f32 %v1557, %v1523
    %v1564 = vadd.f32 %v1559, %v1526
    %v1565 = vadd.f32 %v1561, %v1529
    %v1566 = vmul.f32 %v1562, -0.0025
    %v1567 = vmul.f32 %v1563, -0.0025
    %v1568 = vmul.f32 %v1564, -0.0025
    %v1569 = vmul.f32 %v1565, -0.0025
    %v1570 = vmul.f32 %v1498, 400.0
    %v1571 = vmul.f32 %v1499, 400.0
    %v1572 = vmul.f32 %v1500, 400.0
    %v1573 = vmul.f32 %v1501, 400.0
    %v1574 = vadd.f32 %v383, %v1570
    %v1575 = vadd.f32 %v384, %v1571
    %v1576 = vadd.f32 %v383, %v1572
    %v1577 = vadd.f32 %v384, %v1573
    %v1578 = vsub.f32 %v1574, %v1506
    %v1579 = vsub.f32 %v1575, %v1507
    %v1580 = vsub.f32 %v1576, %v1508
    %v1581 = vsub.f32 %v1577, %v1509
    %v1582 = vsel %vm325, %v1578, -inf
    %v1583 = vsel %vm325, %v1579, -inf
    %v1584 = vmax.f32 %v1582, %v1583
    %v1585 = vrot.slane %v1584, 4
    %v1586 = vmax.f32 %v1584, %v1585
    %v1587 = vrot.slane %v1586, 2
    %v1588 = vmax.f32 %v1586, %v1587
    %v1589 = vrot.slane %v1588, 1
    %v1590 = vmax.f32 %v1588, %v1589
    %v1591 = vsel %vm325, %v1580, -inf
    %v1592 = vsel %vm325, %v1581, -inf
    %v1593 = vmax.f32 %v1591, %v1592
    %v1594 = vrot.slane %v1593, 4
    %v1595 = vmax.f32 %v1593, %v1594
    %v1596 = vrot.slane %v1595, 2
    %v1597 = vmax.f32 %v1595, %v1596
    %v1598 = vrot.slane %v1597, 1
    %v1599 = vmax.f32 %v1597, %v1598
    %v1600 = vsub.f32 %v1578, %v1590
    %v1601 = vsub.f32 %v1579, %v1590
    %v1602 = vsub.f32 %v1580, %v1599
    %v1603 = vsub.f32 %v1581, %v1599
    %v1604 = vmul.f32 %v1600, 1.442695
    %v1605 = vpow.pop %v1604
    %v1606 = vmul.f32 %v1601, 1.442695
    %v1607 = vpow.pop %v1606
    %v1608 = vmul.f32 %v1602, 1.442695
    %v1609 = vpow.pop %v1608
    %v1610 = vmul.f32 %v1603, 1.442695
    %v1611 = vpow.pop %v1610
    %v1612 = vsel %vm325, %v1605, 0.0
    %v1613 = vsel %vm325, %v1607, 0.0
    %v1614 = vadd.f32 %v1612, %v1613
    %v1615 = vrot.slane %v1614, 4
    %v1616 = vadd.f32 %v1614, %v1615
    %v1617 = vrot.slane %v1616, 2
    %v1618 = vadd.f32 %v1616, %v1617
    %v1619 = vrot.slane %v1618, 1
    %v1620 = vadd.f32 %v1618, %v1619
    %v1621 = vsel %vm325, %v1609, 0.0
    %v1622 = vsel %vm325, %v1611, 0.0
    %v1623 = vadd.f32 %v1621, %v1622
    %v1624 = vrot.slane %v1623, 4
    %v1625 = vadd.f32 %v1623, %v1624
    %v1626 = vrot.slane %v1625, 2
    %v1627 = vadd.f32 %v1625, %v1626
    %v1628 = vrot.slane %v1627, 1
    %v1629 = vadd.f32 %v1627, %v1628
    %v1630 = vlog2.pop %v1620
    %v1631 = vmul.f32 %v1630, 0.6931472
    %v1632 = vlog2.pop %v1629
    %v1633 = vmul.f32 %v1632, 0.6931472
    %v1634 = vadd.f32 %v1631, %v1590
    %v1635 = vadd.f32 %v1633, %v1599
    %v1636 = vmul.f32 %v1634, -0.0025
    %v1637 = vmul.f32 %v1635, -0.0025
    %v1638 = vadd.f32 %v1498, %v1566
    %v1639 = vadd.f32 %v1499, %v1567
    %v1640 = vadd.f32 %v1500, %v1568
    %v1641 = vadd.f32 %v1501, %v1569
    %v1642 = vmul.f32 %v1638, 0.5
    %v1643 = vmul.f32 %v1639, 0.5
    %v1644 = vmul.f32 %v1640, 0.5
    %v1645 = vmul.f32 %v1641, 0.5
    %v1646 = vadd.f32 %v1504, %v1636
    %v1647 = vadd.f32 %v1505, %v1637
    %v1648 = vmul.f32 %v1646, 0.5
    %v1649 = vmul.f32 %v1647, 0.5
    %v1650 = vmul.f32 %v1648, 400.0
    %v1651 = vmul.f32 %v1649, 400.0
    %v1652 = vadd.f32 %v385, %v1650
    %v1653 = vadd.f32 %v385, %v1651
    %v1654 = vsub.f32 %v1652, %v1506
    %v1655 = vsub.f32 %v1652, %v1507
    %v1656 = vsub.f32 %v1653, %v1508
    %v1657 = vsub.f32 %v1653, %v1509
    %v1658 = vsel %vm325, %v1654, -inf
    %1659 = vmax.xlane.f32.xlu0 %v1658
    %v1660 = vpop.xlane.xlu0 %1659
    %v1661 = vsel %vm325, %v1655, -inf
    %1662 = vmax.xlane.f32.xlu0 %v1661
    %v1663 = vpop.xlane.xlu0 %1662
    %v1664 = vsel %vm325, %v1656, -inf
    %1665 = vmax.xlane.f32.xlu0 %v1664
    %v1666 = vpop.xlane.xlu0 %1665
    %v1667 = vsel %vm325, %v1657, -inf
    %1668 = vmax.xlane.f32.xlu0 %v1667
    %v1669 = vpop.xlane.xlu0 %1668
    %v1670 = vsub.f32 %v1654, %v1660
    %v1671 = vsub.f32 %v1655, %v1663
    %v1672 = vsub.f32 %v1656, %v1666
    %v1673 = vsub.f32 %v1657, %v1669
    %v1674 = vmul.f32 %v1670, 1.442695
    %v1675 = vpow.pop %v1674
    %v1676 = vmul.f32 %v1671, 1.442695
    %v1677 = vpow.pop %v1676
    %v1678 = vmul.f32 %v1672, 1.442695
    %v1679 = vpow.pop %v1678
    %v1680 = vmul.f32 %v1673, 1.442695
    %v1681 = vpow.pop %v1680
    %v1682 = vsel %vm325, %v1675, 0.0
    %1683 = vadd.xlane.f32.xlu0 %v1682
    %v1684 = vpop.xlane.xlu0 %1683
    %v1685 = vsel %vm325, %v1677, 0.0
    %1686 = vadd.xlane.f32.xlu0 %v1685
    %v1687 = vpop.xlane.xlu0 %1686
    %v1688 = vsel %vm325, %v1679, 0.0
    %1689 = vadd.xlane.f32.xlu0 %v1688
    %v1690 = vpop.xlane.xlu0 %1689
    %v1691 = vsel %vm325, %v1681, 0.0
    %1692 = vadd.xlane.f32.xlu0 %v1691
    %v1693 = vpop.xlane.xlu0 %1692
    %v1694 = vlog2.pop %v1684
    %v1695 = vmul.f32 %v1694, 0.6931472
    %v1696 = vlog2.pop %v1687
    %v1697 = vmul.f32 %v1696, 0.6931472
    %v1698 = vlog2.pop %v1690
    %v1699 = vmul.f32 %v1698, 0.6931472
    %v1700 = vlog2.pop %v1693
    %v1701 = vmul.f32 %v1700, 0.6931472
    %v1702 = vadd.f32 %v1695, %v1660
    %v1703 = vadd.f32 %v1697, %v1663
    %v1704 = vadd.f32 %v1699, %v1666
    %v1705 = vadd.f32 %v1701, %v1669
    %v1706 = vmul.f32 %v1702, -0.0025
    %v1707 = vmul.f32 %v1703, -0.0025
    %v1708 = vmul.f32 %v1704, -0.0025
    %v1709 = vmul.f32 %v1705, -0.0025
    %v1710 = vmul.f32 %v1642, 400.0
    %v1711 = vmul.f32 %v1643, 400.0
    %v1712 = vmul.f32 %v1644, 400.0
    %v1713 = vmul.f32 %v1645, 400.0
    %v1714 = vadd.f32 %v383, %v1710
    %v1715 = vadd.f32 %v384, %v1711
    %v1716 = vadd.f32 %v383, %v1712
    %v1717 = vadd.f32 %v384, %v1713
    %v1718 = vsub.f32 %v1714, %v1506
    %v1719 = vsub.f32 %v1715, %v1507
    %v1720 = vsub.f32 %v1716, %v1508
    %v1721 = vsub.f32 %v1717, %v1509
    %v1722 = vsel %vm325, %v1718, -inf
    %v1723 = vsel %vm325, %v1719, -inf
    %v1724 = vmax.f32 %v1722, %v1723
    %v1725 = vrot.slane %v1724, 4
    %v1726 = vmax.f32 %v1724, %v1725
    %v1727 = vrot.slane %v1726, 2
    %v1728 = vmax.f32 %v1726, %v1727
    %v1729 = vrot.slane %v1728, 1
    %v1730 = vmax.f32 %v1728, %v1729
    %v1731 = vsel %vm325, %v1720, -inf
    %v1732 = vsel %vm325, %v1721, -inf
    %v1733 = vmax.f32 %v1731, %v1732
    %v1734 = vrot.slane %v1733, 4
    %v1735 = vmax.f32 %v1733, %v1734
    %v1736 = vrot.slane %v1735, 2
    %v1737 = vmax.f32 %v1735, %v1736
    %v1738 = vrot.slane %v1737, 1
    %v1739 = vmax.f32 %v1737, %v1738
    %v1740 = vsub.f32 %v1718, %v1730
    %v1741 = vsub.f32 %v1719, %v1730
    %v1742 = vsub.f32 %v1720, %v1739
    %v1743 = vsub.f32 %v1721, %v1739
    %v1744 = vmul.f32 %v1740, 1.442695
    %v1745 = vpow.pop %v1744
    %v1746 = vmul.f32 %v1741, 1.442695
    %v1747 = vpow.pop %v1746
    %v1748 = vmul.f32 %v1742, 1.442695
    %v1749 = vpow.pop %v1748
    %v1750 = vmul.f32 %v1743, 1.442695
    %v1751 = vpow.pop %v1750
    %v1752 = vsel %vm325, %v1745, 0.0
    %v1753 = vsel %vm325, %v1747, 0.0
    %v1754 = vadd.f32 %v1752, %v1753
    %v1755 = vrot.slane %v1754, 4
    %v1756 = vadd.f32 %v1754, %v1755
    %v1757 = vrot.slane %v1756, 2
    %v1758 = vadd.f32 %v1756, %v1757
    %v1759 = vrot.slane %v1758, 1
    %v1760 = vadd.f32 %v1758, %v1759
    %v1761 = vsel %vm325, %v1749, 0.0
    %v1762 = vsel %vm325, %v1751, 0.0
    %v1763 = vadd.f32 %v1761, %v1762
    %v1764 = vrot.slane %v1763, 4
    %v1765 = vadd.f32 %v1763, %v1764
    %v1766 = vrot.slane %v1765, 2
    %v1767 = vadd.f32 %v1765, %v1766
    %v1768 = vrot.slane %v1767, 1
    %v1769 = vadd.f32 %v1767, %v1768
    %v1770 = vlog2.pop %v1760
    %v1771 = vmul.f32 %v1770, 0.6931472
    %v1772 = vlog2.pop %v1769
    %v1773 = vmul.f32 %v1772, 0.6931472
    %v1774 = vadd.f32 %v1771, %v1730
    %v1775 = vadd.f32 %v1773, %v1739
    %v1776 = vmul.f32 %v1774, -0.0025
    %v1777 = vmul.f32 %v1775, -0.0025
    %v1778 = vmul.f32 %v379, %v1706
    %v1779 = vmul.f32 %v380, %v1707
    %v1780 = vmul.f32 %v379, %v1708
    %v1781 = vmul.f32 %v380, %v1709
    %v1782 = vadd.f32 %v1778, %v1779
    %v1783 = vrot.slane %v1782, 4
    %v1784 = vadd.f32 %v1782, %v1783
    %v1785 = vrot.slane %v1784, 2
    %v1786 = vadd.f32 %v1784, %v1785
    %v1787 = vrot.slane %v1786, 1
    %v1788 = vadd.f32 %v1786, %v1787
    %v1789 = vadd.f32 %v1780, %v1781
    %v1790 = vrot.slane %v1789, 4
    %v1791 = vadd.f32 %v1789, %v1790
    %v1792 = vrot.slane %v1791, 2
    %v1793 = vadd.f32 %v1791, %v1792
    %v1794 = vrot.slane %v1793, 1
    %v1795 = vadd.f32 %v1793, %v1794
    %v1796 = vmul.f32 %v382, %v1776
    %v1797 = vmul.f32 %v382, %v1777
    %v1798 = vsel %vm325, %v1796, 0.0
    %1799 = vadd.xlane.f32.xlu0 %v1798
    %v1800 = vpop.xlane.xlu0 %1799
    %v1801 = vsel %vm325, %v1797, 0.0
    %1802 = vadd.xlane.f32.xlu0 %v1801
    %v1803 = vpop.xlane.xlu0 %1802
    %v1804 = vadd.f32 %v1788, %v1800
    %v1805 = vadd.f32 %v1795, %v1803
    %vm1806 = vcmask 0
    %1807 = vst.msk [vmem:[%s4] sm:$0x1] %vm1806, %v1804
    %1808 = vst.msk [vmem:[%s4 + $0x1] sm:$0x1] %vm1806, %v1805
    %v1810 = vsel %vm86, %v78, 0
    %v1813 = vsel %vm86, %v80, 0
    %1815 = vmatprep.subr.mxu0 0.0
    %1816 = vmatpush1.xpose.msra.mxu0 %v1813
    %1817 = vmatprep.subr.mxu0 0.0
    %1818 = vmatpush1.xpose.msra.mxu0 0.0
    %1819 = vmatprep.subr.mxu0 0.0
    %1820 = vmatpush1.xpose.msra.mxu0 0.0
    %1821 = vmatprep.subr.mxu0 0.0
    %1822 = vmatpush1.xpose.msra.mxu0 0.0
    %1823 = vmatprep.subr.mxu0 0.0
    %1824 = vmatpush1.xpose.msra.mxu0 0.0
    %1825 = vmatprep.subr.mxu0 0.0
    %1826 = vmatpush1.xpose.msra.mxu0 0.0
    %1827 = vmatprep.subr.mxu0 0.0
    %1828 = vmatpush1.xpose.msra.mxu0 0.0
    %1829 = vmatprep.subr.mxu0 0.0
    %1830 = vmatpush1.xpose.msra.mxu0 0.0
    %1831 = vmatprep.subr.mxu0 0.0
    %1832 = vmatpush1.xpose.msra.mxu0 0.0
    %1833 = vmatprep.subr.mxu0 0.0
    %1834 = vmatpush1.xpose.msra.mxu0 0.0
    %1835 = vmatprep.subr.mxu0 0.0
    %1836 = vmatpush1.xpose.msra.mxu0 0.0
    %1837 = vmatprep.subr.mxu0 0.0
    %1838 = vmatpush1.xpose.msra.mxu0 0.0
    %1839 = vmatprep.subr.mxu0 0.0
    %1840 = vmatpush1.xpose.msra.mxu0 0.0
    %1841 = vmatprep.subr.mxu0 0.0
    %1842 = vmatpush1.xpose.msra.mxu0 0.0
    %1843 = vmatprep.subr.mxu0 0.0
    %1844 = vmatpush1.xpose.msra.mxu0 0.0
    %1845 = vmatprep.subr.mxu0 0.0
    %1846 = vmatpush1.xpose.msra.mxu0 0.0
    %1847 = vmatprep.subr.mxu0 0.0
    %1848 = vmatpush1.xpose.msra.mxu0 0.0
    %1849 = vmatprep.subr.mxu0 0.0
    %1850 = vmatpush1.xpose.msra.mxu0 0.0
    %1851 = vmatprep.subr.mxu0 0.0
    %1852 = vmatpush1.xpose.msra.mxu0 0.0
    %1853 = vmatprep.subr.mxu0 0.0
    %1854 = vmatpush1.xpose.msra.mxu0 0.0
    %1855 = vmatprep.subr.mxu0 0.0
    %1856 = vmatpush1.xpose.msra.mxu0 0.0
    %1857 = vmatprep.subr.mxu0 0.0
    %1858 = vmatpush1.xpose.msra.mxu0 0.0
    %1859 = vmatprep.subr.mxu0 0.0
    %1860 = vmatpush1.xpose.msra.mxu0 0.0
    %1861 = vmatprep.subr.mxu0 0.0
    %1862 = vmatpush1.xpose.msra.mxu0 0.0
    %1863 = vmatprep.subr.mxu0 0.0
    %1864 = vmatpush1.xpose.msra.mxu0 0.0
    %1865 = vmatprep.subr.mxu0 0.0
    %1866 = vmatpush1.xpose.msra.mxu0 0.0
    %1867 = vmatprep.subr.mxu0 0.0
    %1868 = vmatpush1.xpose.msra.mxu0 0.0
    %1869 = vmatprep.subr.mxu0 0.0
    %1870 = vmatpush1.xpose.msra.mxu0 0.0
    %1871 = vmatprep.subr.mxu0 0.0
    %1872 = vmatpush1.xpose.msra.mxu0 0.0
    %1873 = vmatprep.subr.mxu0 0.0
    %1874 = vmatpush1.xpose.msra.mxu0 0.0
    %1875 = vmatprep.subr.mxu0 0.0
    %1876 = vmatpush1.xpose.msra.mxu0 0.0
    %1877 = vmatprep.subr.mxu0 0.0
    %1878 = vmatpush1.xpose.msra.mxu0 0.0
    %1879 = vmatprep.mubr.f32.mxu0 0.0
    %1880 = vmatmul.mubr.f32.gmra.mrb[0].mxu0 %v1810
    %v1881 = vpop.f32.mrb[0].mxu0
    %v1882 = vadd.f32 0.0, %v1881
    %v1883 = vpop.f32.mrb[0].mxu0
    %1884 = vdwg.mxu0
    %v1886 = vsel %vm86, %v79, 0
    %v1889 = vsel %vm86, %v81, 0
    %1891 = vmatprep.subr.mxu0 0.0
    %1892 = vmatpush1.xpose.msra.mxu0 %v1889
    %1893 = vmatprep.subr.mxu0 0.0
    %1894 = vmatpush1.xpose.msra.mxu0 0.0
    %1895 = vmatprep.subr.mxu0 0.0
    %1896 = vmatpush1.xpose.msra.mxu0 0.0
    %1897 = vmatprep.subr.mxu0 0.0
    %1898 = vmatpush1.xpose.msra.mxu0 0.0
    %1899 = vmatprep.subr.mxu0 0.0
    %1900 = vmatpush1.xpose.msra.mxu0 0.0
    %1901 = vmatprep.subr.mxu0 0.0
    %1902 = vmatpush1.xpose.msra.mxu0 0.0
    %1903 = vmatprep.subr.mxu0 0.0
    %1904 = vmatpush1.xpose.msra.mxu0 0.0
    %1905 = vmatprep.subr.mxu0 0.0
    %1906 = vmatpush1.xpose.msra.mxu0 0.0
    %1907 = vmatprep.subr.mxu0 0.0
    %1908 = vmatpush1.xpose.msra.mxu0 0.0
    %1909 = vmatprep.subr.mxu0 0.0
    %1910 = vmatpush1.xpose.msra.mxu0 0.0
    %1911 = vmatprep.subr.mxu0 0.0
    %1912 = vmatpush1.xpose.msra.mxu0 0.0
    %1913 = vmatprep.subr.mxu0 0.0
    %1914 = vmatpush1.xpose.msra.mxu0 0.0
    %1915 = vmatprep.subr.mxu0 0.0
    %1916 = vmatpush1.xpose.msra.mxu0 0.0
    %1917 = vmatprep.subr.mxu0 0.0
    %1918 = vmatpush1.xpose.msra.mxu0 0.0
    %1919 = vmatprep.subr.mxu0 0.0
    %1920 = vmatpush1.xpose.msra.mxu0 0.0
    %1921 = vmatprep.subr.mxu0 0.0
    %1922 = vmatpush1.xpose.msra.mxu0 0.0
    %1923 = vmatprep.subr.mxu0 0.0
    %1924 = vmatpush1.xpose.msra.mxu0 0.0
    %1925 = vmatprep.subr.mxu0 0.0
    %1926 = vmatpush1.xpose.msra.mxu0 0.0
    %1927 = vmatprep.subr.mxu0 0.0
    %1928 = vmatpush1.xpose.msra.mxu0 0.0
    %1929 = vmatprep.subr.mxu0 0.0
    %1930 = vmatpush1.xpose.msra.mxu0 0.0
    %1931 = vmatprep.subr.mxu0 0.0
    %1932 = vmatpush1.xpose.msra.mxu0 0.0
    %1933 = vmatprep.subr.mxu0 0.0
    %1934 = vmatpush1.xpose.msra.mxu0 0.0
    %1935 = vmatprep.subr.mxu0 0.0
    %1936 = vmatpush1.xpose.msra.mxu0 0.0
    %1937 = vmatprep.subr.mxu0 0.0
    %1938 = vmatpush1.xpose.msra.mxu0 0.0
    %1939 = vmatprep.subr.mxu0 0.0
    %1940 = vmatpush1.xpose.msra.mxu0 0.0
    %1941 = vmatprep.subr.mxu0 0.0
    %1942 = vmatpush1.xpose.msra.mxu0 0.0
    %1943 = vmatprep.subr.mxu0 0.0
    %1944 = vmatpush1.xpose.msra.mxu0 0.0
    %1945 = vmatprep.subr.mxu0 0.0
    %1946 = vmatpush1.xpose.msra.mxu0 0.0
    %1947 = vmatprep.subr.mxu0 0.0
    %1948 = vmatpush1.xpose.msra.mxu0 0.0
    %1949 = vmatprep.subr.mxu0 0.0
    %1950 = vmatpush1.xpose.msra.mxu0 0.0
    %1951 = vmatprep.subr.mxu0 0.0
    %1952 = vmatpush1.xpose.msra.mxu0 0.0
    %1953 = vmatprep.subr.mxu0 0.0
    %1954 = vmatpush1.xpose.msra.mxu0 0.0
    %1955 = vmatprep.mubr.f32.mxu0 0.0
    %1956 = vmatmul.mubr.f32.gmra.mrb[0].mxu0 %v1886
    %v1957 = vpop.f32.mrb[0].mxu0
    %v1958 = vadd.f32 0.0, %v1957
    %v1959 = vpop.f32.mrb[0].mxu0
    %1960 = vdwg.mxu0
    %v1961 = vsub.f32 0.1, %v1882
    %v1962 = vsub.f32 0.1, %v1958
    %v1963 = vmax.f32 %v1961, 0.0
    %v1964 = vmax.f32 %v1962, 0.0
    %vm1965 = vcmask 64512
    %v1966 = vsel %vm1965, %v1963, 0.0
    %1967 = vadd.xlane.f32.xlu0 %v1966
    %v1968 = vpop.xlane.xlu0 %1967
    %v1969 = vsel %vm1965, %v1964, 0.0
    %1970 = vadd.xlane.f32.xlu0 %v1969
    %v1971 = vpop.xlane.xlu0 %1970
    %v1972 = vrot.slane %v1968, 4
    %v1973 = vadd.f32 %v1968, %v1972
    %v1974 = vrot.slane %v1973, 2
    %v1975 = vadd.f32 %v1973, %v1974
    %v1976 = vrot.slane %v1975, 1
    %v1977 = vadd.f32 %v1975, %v1976
    %v1978 = vrot.slane %v1971, 4
    %v1979 = vadd.f32 %v1971, %v1978
    %v1980 = vrot.slane %v1979, 2
    %v1981 = vadd.f32 %v1979, %v1980
    %v1982 = vrot.slane %v1981, 1
    %v1983 = vadd.f32 %v1981, %v1982
    %1984 = vst.msk [vmem:[%s5] sm:$0x1] %vm1806, %v1977
    %1985 = vst.msk [vmem:[%s5 + $0x1] sm:$0x1] %vm1806, %v1983
    // Predicated region
    $region34: #{gml_forward.1} parent=1 // pred_check
      _
    $region35: #{gml_forward.1} parent=1 // pred_check_branch
      %1987 = sbr.rel (0) target = $region37
    $region36: #{gml_forward.1} parent=1 // pred_region
      _
    $region37: #{gml_forward.1} parent=1 // pred_fallthru
      _
    // Predicated region
    $region38: #{gml_forward.1} parent=1 // pred_check
      _
    $region39: #{gml_forward.1} parent=1 // pred_check_branch
      %1989 = sbr.rel (0) target = $region41
    $region40: #{gml_forward.1} parent=1 // pred_region
      _
    $region41: #{gml_forward.1} parent=1 // pred_fallthru
      _
    // Predicated region
    $region42: #{gml_forward.1} parent=1 // pred_check
      _
    $region43: #{gml_forward.1} parent=1 // pred_check_branch
      %1991 = sbr.rel (0) target = $region45
    $region44: #{gml_forward.1} parent=1 // pred_region
      _
    $region45: #{gml_forward.1} parent=1 // pred_fallthru
      _
    // Predicated region
    $region46: #{gml_forward.1} parent=1 // pred_check
      _
    $region47: #{gml_forward.1} parent=1 // pred_check_branch
      %1993 = sbr.rel (0) target = $region49
    $region48: #{gml_forward.1} parent=1 // pred_region
      _
    $region49: #{gml_forward.1} parent=1 // pred_fallthru
      _
    %1994 = vsyncpa [#allocation3], 1
    %1995 = vsyncpa [#allocation5], 1
    %1996 = vsyncpa [#allocation8], 1

</llo_original>
